<compile_context>
chip_gen: v5e
topology: v5e:2x2
jax: 0.10.0
libtpu: 0.0.40
codegen_flags: <defaults>
</compile_context>

<pallas_src>
import jax
import jax.numpy as jnp
from jax.experimental import pallas as pl
from jax.experimental.pallas import tpu as pltpu


_LANE = 128                  # TPU lane width: pad the class dim to this
_DEFAULT_BATCH_TILE = 256    # fills v6e/v7x 256-row MXU; amortizes step cost on v5e
_NEG_INF = -1e30             # f32 bias for padded (fake) classes -> exp() == 0


def _mlp_softmax_kernel(x_ref,
                        w1_ref, b1_ref,
                        w2_ref, b2_ref,
                        w3_ref, b3_ref,
                        wo_ref, bo_ref,
                        out_ref):
    """Fused 3-hidden-layer MLP + output layer + softmax for one batch tile."""
    # x arrives f32 straight from HBM; cast to bf16 in-kernel (overlaps the MXU).
    x = x_ref[...].astype(jnp.bfloat16)

    # Layer 1: bf16 @ bf16 -> f32 accumulate; bias/ReLU in f32.
    h = jnp.dot(x, w1_ref[...], preferred_element_type=jnp.float32) + b1_ref[...]
    h = jnp.maximum(h, 0.0)

    # Layer 2
    h = jnp.dot(h.astype(jnp.bfloat16), w2_ref[...],
                preferred_element_type=jnp.float32) + b2_ref[...]
    h = jnp.maximum(h, 0.0)

    # Layer 3
    h = jnp.dot(h.astype(jnp.bfloat16), w3_ref[...],
                preferred_element_type=jnp.float32) + b3_ref[...]
    h = jnp.maximum(h, 0.0)

    # Output layer (class dim padded to a lane-dense width).
    logits = jnp.dot(h.astype(jnp.bfloat16), wo_ref[...],
                     preferred_element_type=jnp.float32) + bo_ref[...]

    # Softmax over the (padded) class axis; padded logits ~ -inf -> exp = 0.
    m = jnp.max(logits, axis=-1, keepdims=True)
    e = jnp.exp(logits - m)
    denom = jnp.sum(e, axis=-1, keepdims=True)
    # Exact divide: exp (EUP) dominates, and rows sum to 1 to f32 precision.
    out_ref[...] = (e / denom).astype(out_ref.dtype)


def _pick_batch_tile(batch, requested):
    """Tile selection: big tiles for MXU/step-overhead, but keep >=2 grid steps
    (v7x megacore) when the batch is large enough.  Always a multiple of 16."""
    tile = min(requested, max(16, ((batch + 15) // 16) * 16))
    if batch > 16 and pl.cdiv(batch, tile) < 2:
        tile = max(16, ((pl.cdiv(batch, 2) + 15) // 16) * 16)
    return tile


def genre_classifier_forward(x, params, *, batch_tile=_DEFAULT_BATCH_TILE,
                             out_dtype=jnp.float32):
    """Fused forward pass. x: (B, input_size) float32. params: dict from init_params.

    Returns (B, output_size) probabilities.  Rows past B and the padded fake
    classes are produced by the kernel but sliced off here (garbage rows from
    the ragged last block never escape this wrapper).
    """
    B, in_features = x.shape

    w1, b1 = params["w1"], params["b1"]
    w2, b2 = params["w2"], params["b2"]
    w3, b3 = params["w3"], params["b3"]
    wo, bo = params["wo"], params["bo"]
    out_size = wo.shape[1]

    # --- pad the class dim to a lane-dense multiple of 128 ------------------
    out_pad = max(_LANE, pl.cdiv(out_size, _LANE) * _LANE)
    if out_pad != out_size:
        wo = jnp.pad(wo, ((0, 0), (0, out_pad - out_size)))
        bo = jnp.pad(bo, ((0, 0), (0, out_pad - out_size)),
                     constant_values=_NEG_INF)

    # Weights as bf16 MXU operands (cast once here; they are fetched once per
    # call).  Biases stay f32.  x is NOT cast here: the kernel casts in-VMEM.
    w1, w2, w3, wo = (w.astype(jnp.bfloat16) for w in (w1, w2, w3, wo))
    b1, b2, b3, bo = (b.astype(jnp.float32) for b in (b1, b2, b3, bo))

    tile = _pick_batch_tile(B, batch_tile)
    grid = (pl.cdiv(B, tile),)   # last block may overhang B (ragged): OOB input
                                 # rows are garbage, OOB output writes are dropped.

    h1, h2, h3 = w1.shape[1], w2.shape[1], w3.shape[1]

    # --- VMEM budgeting (only raise the scoped limit if we'd exceed defaults) --
    weight_bytes = 2 * (in_features * h1 + h1 * h2 + h2 * h3 + h3 * out_pad)
    bias_bytes = 4 * (h1 + h2 + h3 + out_pad)
    io_bytes = tile * in_features * 4 + tile * out_pad * jnp.dtype(out_dtype).itemsize
    vmem_est = (2 * (weight_bytes + bias_bytes + io_bytes)        # double buffering
                + 4 * tile * max(h1, h2, h3, out_pad) * 4)        # intermediate slack
    compiler_kwargs = dict(dimension_semantics=("parallel",))
    if vmem_est > 24 * 1024 * 1024:
        # Budget against v7x: 64 MiB physical / 32 MiB default scoped limit.
        compiler_kwargs["vmem_limit_bytes"] = min(int(vmem_est * 3 // 2),
                                                  60 * 1024 * 1024)

    # --- cost estimate for XLA's scheduler -----------------------------------
    rows = grid[0] * tile
    flops = 2 * rows * (in_features * h1 + h1 * h2 + h2 * h3 + h3 * out_pad)
    bytes_accessed = (B * in_features * 4 + weight_bytes + bias_bytes
                      + B * out_pad * jnp.dtype(out_dtype).itemsize)
    cost = pl.CostEstimate(flops=flops,
                           transcendentals=rows * out_pad,   # exp in softmax
                           bytes_accessed=bytes_accessed)

    def full_spec(arr):
        # Weights/biases are replicated (constant block index) across the grid.
        return pl.BlockSpec(arr.shape, lambda i: (0,) * arr.ndim)

    out = pl.pallas_call(
        _mlp_softmax_kernel,
        out_shape=jax.ShapeDtypeStruct((B, out_pad), out_dtype),
        grid_spec=pltpu.PrefetchScalarGridSpec(
            num_scalar_prefetch=0,
            grid=grid,
            in_specs=[
                pl.BlockSpec((tile, in_features), lambda i: (i, 0)),
                full_spec(w1), full_spec(b1),
                full_spec(w2), full_spec(b2),
                full_spec(w3), full_spec(b3),
                full_spec(wo), full_spec(bo),
            ],
            out_specs=pl.BlockSpec((tile, out_pad), lambda i: (i, 0)),
        ),
        compiler_params=pltpu.CompilerParams(**compiler_kwargs),
        cost_estimate=cost,
    )(x, w1, b1, w2, b2, w3, b3, wo, bo)

    # Strip the fake (padded) classes; lane-dense store already happened.
    return out[:, :out_size]


def init_params(key, input_size, hidden_sizes, output_size):
    """Deterministic PyTorch-style Linear init: U(-1/sqrt(fan_in), 1/sqrt(fan_in)).
    Weights stored as (in, out) for the kernel's x @ W convention."""
    sizes = [input_size] + list(hidden_sizes) + [output_size]
    names = ["1", "2", "3", "o"]
    params = {}
    for name, (fan_in, fan_out) in zip(names, zip(sizes[:-1], sizes[1:])):
        key, kw, kb = jax.random.split(key, 3)
        bound = 1.0 / jnp.sqrt(float(fan_in))
        params[f"w{name}"] = jax.random.uniform(
            kw, (fan_in, fan_out), jnp.float32, -bound, bound)
        # bias kept 2D (1, fan_out) for TPU-friendly broadcasting
        params[f"b{name}"] = jax.random.uniform(
            kb, (1, fan_out), jnp.float32, -bound, bound)
    return params


def reference_forward(x, params):
    """Pure-JAX f32 reference of the PyTorch forward."""
    h = x
    for name in ["1", "2", "3"]:
        h = jnp.maximum(h @ params[f"w{name}"] + params[f"b{name}"], 0.0)
    logits = h @ params["wo"] + params["bo"]
    return jax.nn.softmax(logits, axis=1)


if __name__ == "__main__":
    # Small shapes consistent with the module (MLP over LDA topic vectors).
    batch = 200               # not a tile multiple -> exercises ragged last block
    input_size = 256          # stands in for num_topics=2048
    hidden_sizes = [128, 128, 128]   # stands in for [512, 512, 512]
    output_size = 8           # number of genres

    key = jax.random.PRNGKey(0)
    key, kx = jax.random.split(key)
    x = jax.random.normal(kx, (batch, input_size), jnp.float32)
    params = init_params(key, input_size, hidden_sizes, output_size)

    out = genre_classifier_forward(x, params)
    out = jax.block_until_ready(out)

    ref = reference_forward(x, params)
    assert out.shape == (batch, output_size)
    # bf16 matmul operands -> loosened tolerance vs. f32 reference.
    assert jnp.allclose(out, ref, atol=2e-2, rtol=2e-2)
    # Exact softmax divide -> rows sum to 1 to f32 precision.
    assert jnp.allclose(jnp.sum(out, axis=1), 1.0, atol=1e-3)

    print("KERNEL_OK")
</pallas_src>

<mosaic_0001>
module attributes {stable_mosaic.version = 11 : i64} {
  func.func @_mlp_softmax_kernel(%arg0: i32, %arg1: memref<112x256xf32, #tpu.memory_space<vmem>>, %arg2: memref<256x128xbf16, #tpu.memory_space<vmem>>, %arg3: memref<1x128xf32, #tpu.memory_space<vmem>>, %arg4: memref<128x128xbf16, #tpu.memory_space<vmem>>, %arg5: memref<1x128xf32, #tpu.memory_space<vmem>>, %arg6: memref<128x128xbf16, #tpu.memory_space<vmem>>, %arg7: memref<1x128xf32, #tpu.memory_space<vmem>>, %arg8: memref<128x128xbf16, #tpu.memory_space<vmem>>, %arg9: memref<1x128xf32, #tpu.memory_space<vmem>>, %arg10: memref<112x128xf32, #tpu.memory_space<vmem>>) attributes {dimension_semantics = [#tpu.dimension_semantics<parallel>], iteration_bounds = array<i64: 2>, scalar_prefetch = 0 : i64, scratch_operands = 0 : i64, tpu.core_type = #tpu.core_type<tc>, window_params = [{transform_indices = @transform_0, window_bounds = array<i64: 112, 256>}, {pipeline_mode = #tpu.pipeline_mode<synchronous>, transform_indices = @transform_1, window_bounds = array<i64: 256, 128>}, {pipeline_mode = #tpu.pipeline_mode<synchronous>, transform_indices = @transform_2, window_bounds = array<i64: 1, 128>}, {pipeline_mode = #tpu.pipeline_mode<synchronous>, transform_indices = @transform_3, window_bounds = array<i64: 128, 128>}, {pipeline_mode = #tpu.pipeline_mode<synchronous>, transform_indices = @transform_4, window_bounds = array<i64: 1, 128>}, {pipeline_mode = #tpu.pipeline_mode<synchronous>, transform_indices = @transform_5, window_bounds = array<i64: 128, 128>}, {pipeline_mode = #tpu.pipeline_mode<synchronous>, transform_indices = @transform_6, window_bounds = array<i64: 1, 128>}, {pipeline_mode = #tpu.pipeline_mode<synchronous>, transform_indices = @transform_7, window_bounds = array<i64: 128, 128>}, {pipeline_mode = #tpu.pipeline_mode<synchronous>, transform_indices = @transform_8, window_bounds = array<i64: 1, 128>}, {transform_indices = @transform_9, window_bounds = array<i64: 112, 128>}]} {
    %c0 = arith.constant 0 : index
    %c0_0 = arith.constant 0 : index
    %0 = vector.load %arg1[%c0, %c0_0] : memref<112x256xf32, #tpu.memory_space<vmem>>, vector<112x256xf32>
    %1 = arith.truncf %0 : vector<112x256xf32> to vector<112x256xbf16>
    %c0_1 = arith.constant 0 : index
    %c0_2 = arith.constant 0 : index
    %2 = vector.load %arg2[%c0_1, %c0_2] : memref<256x128xbf16, #tpu.memory_space<vmem>>, vector<256x128xbf16>
    %cst = arith.constant dense<0.000000e+00> : vector<112x128xf32>
    %3 = tpu.matmul %1, %2, %cst {dimension_numbers = #tpu.dot_dimension_numbers<[1], [0], [0], [1], [0, 0, 1, 1], [], []>} : vector<112x256xbf16>, vector<256x128xbf16>, vector<112x128xf32> -> vector<112x128xf32>
    %c0_3 = arith.constant 0 : index
    %c0_4 = arith.constant 0 : index
    %4 = vector.load %arg3[%c0_3, %c0_4] : memref<1x128xf32, #tpu.memory_space<vmem>>, vector<1x128xf32>
    %5 = vector.broadcast %4 : vector<1x128xf32> to vector<112x128xf32>
    %6 = arith.addf %3, %5 : vector<112x128xf32>
    %cst_5 = arith.constant 0.000000e+00 : f32
    %7 = vector.broadcast %cst_5 : f32 to vector<112x128xf32>
    %8 = arith.maximumf %6, %7 : vector<112x128xf32>
    %9 = arith.truncf %8 : vector<112x128xf32> to vector<112x128xbf16>
    %c0_6 = arith.constant 0 : index
    %c0_7 = arith.constant 0 : index
    %10 = vector.load %arg4[%c0_6, %c0_7] : memref<128x128xbf16, #tpu.memory_space<vmem>>, vector<128x128xbf16>
    %cst_8 = arith.constant dense<0.000000e+00> : vector<112x128xf32>
    %11 = tpu.matmul %9, %10, %cst_8 {dimension_numbers = #tpu.dot_dimension_numbers<[1], [0], [0], [1], [0, 0, 1, 1], [], []>} : vector<112x128xbf16>, vector<128x128xbf16>, vector<112x128xf32> -> vector<112x128xf32>
    %c0_9 = arith.constant 0 : index
    %c0_10 = arith.constant 0 : index
    %12 = vector.load %arg5[%c0_9, %c0_10] : memref<1x128xf32, #tpu.memory_space<vmem>>, vector<1x128xf32>
    %13 = vector.broadcast %12 : vector<1x128xf32> to vector<112x128xf32>
    %14 = arith.addf %11, %13 : vector<112x128xf32>
    %cst_11 = arith.constant 0.000000e+00 : f32
    %15 = vector.broadcast %cst_11 : f32 to vector<112x128xf32>
    %16 = arith.maximumf %14, %15 : vector<112x128xf32>
    %17 = arith.truncf %16 : vector<112x128xf32> to vector<112x128xbf16>
    %c0_12 = arith.constant 0 : index
    %c0_13 = arith.constant 0 : index
    %18 = vector.load %arg6[%c0_12, %c0_13] : memref<128x128xbf16, #tpu.memory_space<vmem>>, vector<128x128xbf16>
    %cst_14 = arith.constant dense<0.000000e+00> : vector<112x128xf32>
    %19 = tpu.matmul %17, %18, %cst_14 {dimension_numbers = #tpu.dot_dimension_numbers<[1], [0], [0], [1], [0, 0, 1, 1], [], []>} : vector<112x128xbf16>, vector<128x128xbf16>, vector<112x128xf32> -> vector<112x128xf32>
    %c0_15 = arith.constant 0 : index
    %c0_16 = arith.constant 0 : index
    %20 = vector.load %arg7[%c0_15, %c0_16] : memref<1x128xf32, #tpu.memory_space<vmem>>, vector<1x128xf32>
    %21 = vector.broadcast %20 : vector<1x128xf32> to vector<112x128xf32>
    %22 = arith.addf %19, %21 : vector<112x128xf32>
    %cst_17 = arith.constant 0.000000e+00 : f32
    %23 = vector.broadcast %cst_17 : f32 to vector<112x128xf32>
    %24 = arith.maximumf %22, %23 : vector<112x128xf32>
    %25 = arith.truncf %24 : vector<112x128xf32> to vector<112x128xbf16>
    %c0_18 = arith.constant 0 : index
    %c0_19 = arith.constant 0 : index
    %26 = vector.load %arg8[%c0_18, %c0_19] : memref<128x128xbf16, #tpu.memory_space<vmem>>, vector<128x128xbf16>
    %cst_20 = arith.constant dense<0.000000e+00> : vector<112x128xf32>
    %27 = tpu.matmul %25, %26, %cst_20 {dimension_numbers = #tpu.dot_dimension_numbers<[1], [0], [0], [1], [0, 0, 1, 1], [], []>} : vector<112x128xbf16>, vector<128x128xbf16>, vector<112x128xf32> -> vector<112x128xf32>
    %c0_21 = arith.constant 0 : index
    %c0_22 = arith.constant 0 : index
    %28 = vector.load %arg9[%c0_21, %c0_22] : memref<1x128xf32, #tpu.memory_space<vmem>>, vector<1x128xf32>
    %29 = vector.broadcast %28 : vector<1x128xf32> to vector<112x128xf32>
    %30 = arith.addf %27, %29 : vector<112x128xf32>
    %cst_23 = arith.constant dense<0xFF800000> : vector<112xf32>
    %31 = vector.multi_reduction <maximumf>, %30, %cst_23 [1] : vector<112x128xf32> to vector<112xf32>
    %32 = vector.shape_cast %31 : vector<112xf32> to vector<112x1xf32>
    %33 = vector.broadcast %32 : vector<112x1xf32> to vector<112x128xf32>
    %34 = arith.subf %30, %33 : vector<112x128xf32>
    %35 = math.exp %34 : vector<112x128xf32>
    %cst_24 = arith.constant dense<0.000000e+00> : vector<112xf32>
    %36 = vector.multi_reduction <add>, %35, %cst_24 [1] : vector<112x128xf32> to vector<112xf32>
    %37 = vector.shape_cast %36 : vector<112xf32> to vector<112x1xf32>
    %38 = vector.broadcast %37 : vector<112x1xf32> to vector<112x128xf32>
    %39 = arith.divf %35, %38 : vector<112x128xf32>
    %c0_25 = arith.constant 0 : index
    %c0_26 = arith.constant 0 : index
    %40 = vector.load %arg10[%c0_25, %c0_26] : memref<112x128xf32, #tpu.memory_space<vmem>>, vector<112x128xf32>
    tpu.vector_store %arg10[%c0_25, %c0_26], %39 {strides = array<i32>} : memref<112x128xf32, #tpu.memory_space<vmem>>, vector<112x128xf32>,
    return
  }
  func.func @transform_0(%arg0: i32) -> (i32, i32) {
    %c0_i32 = arith.constant 0 : i32
    %c0_i32_0 = arith.constant 0 : i32
    return %arg0, %c0_i32 : i32, i32
  }
  func.func @transform_1(%arg0: i32) -> (i32, i32) {
    %c0_i32 = arith.constant 0 : i32
    %c0_i32_0 = arith.constant 0 : i32
    %c0_i32_1 = arith.constant 0 : i32
    return %c0_i32, %c0_i32_0 : i32, i32
  }
  func.func @transform_2(%arg0: i32) -> (i32, i32) {
    %c0_i32 = arith.constant 0 : i32
    %c0_i32_0 = arith.constant 0 : i32
    %c0_i32_1 = arith.constant 0 : i32
    return %c0_i32, %c0_i32_0 : i32, i32
  }
  func.func @transform_3(%arg0: i32) -> (i32, i32) {
    %c0_i32 = arith.constant 0 : i32
    %c0_i32_0 = arith.constant 0 : i32
    %c0_i32_1 = arith.constant 0 : i32
    return %c0_i32, %c0_i32_0 : i32, i32
  }
  func.func @transform_4(%arg0: i32) -> (i32, i32) {
    %c0_i32 = arith.constant 0 : i32
    %c0_i32_0 = arith.constant 0 : i32
    %c0_i32_1 = arith.constant 0 : i32
    return %c0_i32, %c0_i32_0 : i32, i32
  }
  func.func @transform_5(%arg0: i32) -> (i32, i32) {
    %c0_i32 = arith.constant 0 : i32
    %c0_i32_0 = arith.constant 0 : i32
    %c0_i32_1 = arith.constant 0 : i32
    return %c0_i32, %c0_i32_0 : i32, i32
  }
  func.func @transform_6(%arg0: i32) -> (i32, i32) {
    %c0_i32 = arith.constant 0 : i32
    %c0_i32_0 = arith.constant 0 : i32
    %c0_i32_1 = arith.constant 0 : i32
    return %c0_i32, %c0_i32_0 : i32, i32
  }
  func.func @transform_7(%arg0: i32) -> (i32, i32) {
    %c0_i32 = arith.constant 0 : i32
    %c0_i32_0 = arith.constant 0 : i32
    %c0_i32_1 = arith.constant 0 : i32
    return %c0_i32, %c0_i32_0 : i32, i32
  }
  func.func @transform_8(%arg0: i32) -> (i32, i32) {
    %c0_i32 = arith.constant 0 : i32
    %c0_i32_0 = arith.constant 0 : i32
    %c0_i32_1 = arith.constant 0 : i32
    return %c0_i32, %c0_i32_0 : i32, i32
  }
  func.func @transform_9(%arg0: i32) -> (i32, i32) {
    %c0_i32 = arith.constant 0 : i32
    %c0_i32_0 = arith.constant 0 : i32
    return %arg0, %c0_i32 : i32, i32
  }
}

</mosaic_0001>

<llo_original>
// kernel: tpu_custom_call.1
$region0: #{tpu_custom_call.1}
  #allocation0 [shape = 'u32[]', space=smem, size = 0x4, offset = 0x4, fixed_abs, tag = 'smem constant byte address 0x4 - core index']
  #allocation1 [shape = 'u32[72,128]{1,0:T(1,128)}', space=vmem, size = 0x9000, scoped, tag = 'internal scratch']
  %s0 = inlined_call_operand.hbm [shape: f32[200,256], index: 0, kind: input, shape index: {}]
  %s1 = inlined_call_operand.hbm [shape: bf16[256,128], index: 1, kind: input, shape index: {}]
  %s2 = inlined_call_operand.vmem [shape: f32[1,128], index: 2, kind: input, shape index: {}]
  %s3 = inlined_call_operand.hbm [shape: bf16[128,128], index: 3, kind: input, shape index: {}]
  %s4 = inlined_call_operand.vmem [shape: f32[1,128], index: 4, kind: input, shape index: {}]
  %s5 = inlined_call_operand.hbm [shape: bf16[128,128], index: 5, kind: input, shape index: {}]
  %s6 = inlined_call_operand.vmem [shape: f32[1,128], index: 6, kind: input, shape index: {}]
  %s7 = inlined_call_operand.hbm [shape: bf16[128,128], index: 7, kind: input, shape index: {}]
  %s8 = inlined_call_operand.vmem [shape: f32[1,128], index: 8, kind: input, shape index: {}]
  %s9 = inlined_call_operand.hbm [shape: f32[200,128], index: 9, kind: output, shape index: {}]
  %s10 = sld [smem:[#allocation0]]
  $region89: #{tpu_custom_call.1} parent=0
    _
  %s12 = ssub.s32 1, %s10
  %s13 = scalar_select 0, %s12, %s10
  $region1: #{tpu_custom_call.1} parent=0
    #allocation2 [shape = 'u8[229376]{0}', space=vmem, size = 0x38000, scoped, tag = 'input window, operand 0']
    #allocation3 [shape = 's32[2]{0}', space=sflag, size = 0x8, scoped, tag = 'scoped memory for tpu_custom_call.1']
    #allocation4 [shape = 's32[2]{0}', space=sflag, size = 0x8, scoped, tag = 'scoped memory for tpu_custom_call.1']
    #allocation5 [shape = 'u8[65536]{0}', space=vmem, size = 0x10000, scoped, tag = 'input window, operand 1, single buffered']
    #allocation6 [shape = 's32[1]{0}', space=sflag, size = 0x4, scoped, tag = 'scoped memory for tpu_custom_call.1']
    #allocation7 [shape = 'u8[32768]{0}', space=vmem, size = 0x8000, scoped, tag = 'input window, operand 3, single buffered']
    #allocation8 [shape = 'u8[32768]{0}', space=vmem, size = 0x8000, scoped, tag = 'input window, operand 5, single buffered']
    #allocation9 [shape = 's32[1]{0}', space=sflag, size = 0x4, scoped, tag = 'scoped memory for tpu_custom_call.1']
    #allocation10 [shape = 'u8[32768]{0}', space=vmem, size = 0x8000, scoped, tag = 'input window, operand 7, single buffered']
    #allocation11 [shape = 'u8[114688]{0}', space=vmem, size = 0x1c000, scoped, tag = 'output window, operand 0']
    %14 = vsyncpa [#allocation3], 0
    %s15 = scalar_lea.sflag [#allocation3], 1
    %16 = vsyncpa %s15, 0
    %17 = vsyncpa [#allocation6], 0
    %18 = vsyncpa [#allocation9], 0
    %19 = vsyncpa [#allocation4], 0
    %s20 = scalar_lea.sflag [#allocation4], 1
    %21 = vsyncpa %s20, 0
    loop: start=0, step=1, limit=4
    $region2: #{tpu_custom_call.1} parent=1 // loop_pre_header
      _
    $region3: #{tpu_custom_call.1} parent=1 // loop_header
      %s23 = sphi 0, %s27
      %p24 = scmp.ge.s32.totalorder %s23, 4
      %s33 = sphi 0, %s35
      %s36 = sphi 0, %s33
      %s37 = sphi 0, %s36
      %s53 = sphi 0, %s37
      %s57 = sphi 0, %s57
      %s59 = sphi 0, %s57
      %s60 = sphi 0, %s59
      %s74 = sphi 0, %s60
      %s78 = sphi 0, %s78
      %s80 = sphi 0, %s78
      %s81 = sphi 0, %s80
      %s95 = sphi 0, %s81
      %s99 = sphi 0, %s99
      %s101 = sphi 0, %s99
      %s102 = sphi 0, %s101
      %s116 = sphi 0, %s102
      %s120 = sphi 0, %s120
      %s122 = sphi 0, %s120
      %s123 = sphi 0, %s122
      %s137 = sphi 0, %s123
      %s141 = sphi 0, %s141
      %s143 = sphi 0, %s141
      %s144 = sphi 0, %s143
      %s158 = sphi 0, %s144
      %s162 = sphi 0, %s162
      %s164 = sphi 0, %s162
      %s165 = sphi 0, %s164
      %s179 = sphi 0, %s165
      %s183 = sphi 0, %s183
      %s185 = sphi 0, %s183
      %s186 = sphi 0, %s185
      %s200 = sphi 0, %s186
      %s204 = sphi 0, %s204
      %s206 = sphi 0, %s204
      %s207 = sphi 0, %s206
      %s221 = sphi 0, %s207
      %s227 = sphi 0, %s229
      %s230 = sphi 0, %s227
      %s231 = sphi 0, %s230
      %s247 = sphi 0, %s231
    $region4: #{tpu_custom_call.1} parent=1 // loop_header_branch
      %26 = sbr.rel (%p24) target = $region8
    $region5: #{tpu_custom_call.1} parent=1 // loop_body
      %s28 = ssub.s32 %s23, 1
      %s29 = ssub.s32 %s23, 2
      %s30 = sadd.s32 %s23, 1
      %s31 = ssub.s32 %s23, %s30
      %p32 = scmp.eq.s32.totalorder %s31, 0
      %s34 = sadd.s32 %s33, 1
      %s35 = scalar_select %p32, %s33, %s34
      %p38 = pneg %p32
      %p39 = scmp.eq.s32.totalorder %s23, 1
      %p40 = por %p38, %p39
      %p41 = scmp.ne.s32.totalorder %s33, %s36
      %p42 = scmp.eq.s32.totalorder %s23, 0
      %p43 = por %p41, %p42
      %p44 = scmp.ne.s32.totalorder %s33, %s36
      %p45 = scmp.eq.s32.totalorder %s28, 1
      %p46 = por %p44, %p45
      %p47 = scmp.ne.s32.totalorder %s36, %s37
      %p48 = scmp.eq.s32.totalorder %s28, 0
      %p49 = por %p47, %p48
      %p50 = scmp.ne.s32.totalorder %s36, %s37
      %p51 = scmp.eq.s32.totalorder %s29, 1
      %p52 = por %p50, %p51
      %p54 = scmp.ne.s32.totalorder %s37, %s53
      %p55 = scmp.eq.s32.totalorder %s29, 0
      %p56 = por %p54, %p55
      %s58 = sadd.s32 %s57, 1
      %p61 = scmp.eq.s32.totalorder %s23, 1
      %p62 = scmp.ne.s32.totalorder %s57, %s59
      %p63 = scmp.eq.s32.totalorder %s23, 0
      %p64 = por %p62, %p63
      %p65 = scmp.ne.s32.totalorder %s57, %s59
      %p66 = scmp.eq.s32.totalorder %s28, 1
      %p67 = por %p65, %p66
      %p68 = scmp.ne.s32.totalorder %s59, %s60
      %p69 = scmp.eq.s32.totalorder %s28, 0
      %p70 = por %p68, %p69
      %p71 = scmp.ne.s32.totalorder %s59, %s60
      %p72 = scmp.eq.s32.totalorder %s29, 1
      %p73 = por %p71, %p72
      %p75 = scmp.ne.s32.totalorder %s60, %s74
      %p76 = scmp.eq.s32.totalorder %s29, 0
      %p77 = por %p75, %p76
      %s79 = sadd.s32 %s78, 1
      %p82 = scmp.eq.s32.totalorder %s23, 1
      %p83 = scmp.ne.s32.totalorder %s78, %s80
      %p84 = scmp.eq.s32.totalorder %s23, 0
      %p85 = por %p83, %p84
      %p86 = scmp.ne.s32.totalorder %s78, %s80
      %p87 = scmp.eq.s32.totalorder %s28, 1
      %p88 = por %p86, %p87
      %p89 = scmp.ne.s32.totalorder %s80, %s81
      %p90 = scmp.eq.s32.totalorder %s28, 0
      %p91 = por %p89, %p90
      %p92 = scmp.ne.s32.totalorder %s80, %s81
      %p93 = scmp.eq.s32.totalorder %s29, 1
      %p94 = por %p92, %p93
      %p96 = scmp.ne.s32.totalorder %s81, %s95
      %p97 = scmp.eq.s32.totalorder %s29, 0
      %p98 = por %p96, %p97
      %s100 = sadd.s32 %s99, 1
      %p103 = scmp.eq.s32.totalorder %s23, 1
      %p104 = scmp.ne.s32.totalorder %s99, %s101
      %p105 = scmp.eq.s32.totalorder %s23, 0
      %p106 = por %p104, %p105
      %p107 = scmp.ne.s32.totalorder %s99, %s101
      %p108 = scmp.eq.s32.totalorder %s28, 1
      %p109 = por %p107, %p108
      %p110 = scmp.ne.s32.totalorder %s101, %s102
      %p111 = scmp.eq.s32.totalorder %s28, 0
      %p112 = por %p110, %p111
      %p113 = scmp.ne.s32.totalorder %s101, %s102
      %p114 = scmp.eq.s32.totalorder %s29, 1
      %p115 = por %p113, %p114
      %p117 = scmp.ne.s32.totalorder %s102, %s116
      %p118 = scmp.eq.s32.totalorder %s29, 0
      %p119 = por %p117, %p118
      %s121 = sadd.s32 %s120, 1
      %p124 = scmp.eq.s32.totalorder %s23, 1
      %p125 = scmp.ne.s32.totalorder %s120, %s122
      %p126 = scmp.eq.s32.totalorder %s23, 0
      %p127 = por %p125, %p126
      %p128 = scmp.ne.s32.totalorder %s120, %s122
      %p129 = scmp.eq.s32.totalorder %s28, 1
      %p130 = por %p128, %p129
      %p131 = scmp.ne.s32.totalorder %s122, %s123
      %p132 = scmp.eq.s32.totalorder %s28, 0
      %p133 = por %p131, %p132
      %p134 = scmp.ne.s32.totalorder %s122, %s123
      %p135 = scmp.eq.s32.totalorder %s29, 1
      %p136 = por %p134, %p135
      %p138 = scmp.ne.s32.totalorder %s123, %s137
      %p139 = scmp.eq.s32.totalorder %s29, 0
      %p140 = por %p138, %p139
      %s142 = sadd.s32 %s141, 1
      %p145 = scmp.eq.s32.totalorder %s23, 1
      %p146 = scmp.ne.s32.totalorder %s141, %s143
      %p147 = scmp.eq.s32.totalorder %s23, 0
      %p148 = por %p146, %p147
      %p149 = scmp.ne.s32.totalorder %s141, %s143
      %p150 = scmp.eq.s32.totalorder %s28, 1
      %p151 = por %p149, %p150
      %p152 = scmp.ne.s32.totalorder %s143, %s144
      %p153 = scmp.eq.s32.totalorder %s28, 0
      %p154 = por %p152, %p153
      %p155 = scmp.ne.s32.totalorder %s143, %s144
      %p156 = scmp.eq.s32.totalorder %s29, 1
      %p157 = por %p155, %p156
      %p159 = scmp.ne.s32.totalorder %s144, %s158
      %p160 = scmp.eq.s32.totalorder %s29, 0
      %p161 = por %p159, %p160
      %s163 = sadd.s32 %s162, 1
      %p166 = scmp.eq.s32.totalorder %s23, 1
      %p167 = scmp.ne.s32.totalorder %s162, %s164
      %p168 = scmp.eq.s32.totalorder %s23, 0
      %p169 = por %p167, %p168
      %p170 = scmp.ne.s32.totalorder %s162, %s164
      %p171 = scmp.eq.s32.totalorder %s28, 1
      %p172 = por %p170, %p171
      %p173 = scmp.ne.s32.totalorder %s164, %s165
      %p174 = scmp.eq.s32.totalorder %s28, 0
      %p175 = por %p173, %p174
      %p176 = scmp.ne.s32.totalorder %s164, %s165
      %p177 = scmp.eq.s32.totalorder %s29, 1
      %p178 = por %p176, %p177
      %p180 = scmp.ne.s32.totalorder %s165, %s179
      %p181 = scmp.eq.s32.totalorder %s29, 0
      %p182 = por %p180, %p181
      %s184 = sadd.s32 %s183, 1
      %p187 = scmp.eq.s32.totalorder %s23, 1
      %p188 = scmp.ne.s32.totalorder %s183, %s185
      %p189 = scmp.eq.s32.totalorder %s23, 0
      %p190 = por %p188, %p189
      %p191 = scmp.ne.s32.totalorder %s183, %s185
      %p192 = scmp.eq.s32.totalorder %s28, 1
      %p193 = por %p191, %p192
      %p194 = scmp.ne.s32.totalorder %s185, %s186
      %p195 = scmp.eq.s32.totalorder %s28, 0
      %p196 = por %p194, %p195
      %p197 = scmp.ne.s32.totalorder %s185, %s186
      %p198 = scmp.eq.s32.totalorder %s29, 1
      %p199 = por %p197, %p198
      %p201 = scmp.ne.s32.totalorder %s186, %s200
      %p202 = scmp.eq.s32.totalorder %s29, 0
      %p203 = por %p201, %p202
      %s205 = sadd.s32 %s204, 1
      %p208 = scmp.eq.s32.totalorder %s23, 1
      %p209 = scmp.ne.s32.totalorder %s204, %s206
      %p210 = scmp.eq.s32.totalorder %s23, 0
      %p211 = por %p209, %p210
      %p212 = scmp.ne.s32.totalorder %s204, %s206
      %p213 = scmp.eq.s32.totalorder %s28, 1
      %p214 = por %p212, %p213
      %p215 = scmp.ne.s32.totalorder %s206, %s207
      %p216 = scmp.eq.s32.totalorder %s28, 0
      %p217 = por %p215, %p216
      %p218 = scmp.ne.s32.totalorder %s206, %s207
      %p219 = scmp.eq.s32.totalorder %s29, 1
      %p220 = por %p218, %p219
      %p222 = scmp.ne.s32.totalorder %s207, %s221
      %p223 = scmp.eq.s32.totalorder %s29, 0
      %p224 = por %p222, %p223
      %s225 = ssub.s32 %s23, %s30
      %p226 = scmp.eq.s32.totalorder %s225, 0
      %s228 = sadd.s32 %s227, 1
      %s229 = scalar_select %p226, %s227, %s228
      %p232 = pneg %p226
      %p233 = scmp.eq.s32.totalorder %s23, 1
      %p234 = por %p232, %p233
      %p235 = scmp.ne.s32.totalorder %s227, %s230
      %p236 = scmp.eq.s32.totalorder %s23, 0
      %p237 = por %p235, %p236
      %p238 = scmp.ne.s32.totalorder %s227, %s230
      %p239 = scmp.eq.s32.totalorder %s28, 1
      %p240 = por %p238, %p239
      %p241 = scmp.ne.s32.totalorder %s230, %s231
      %p242 = scmp.eq.s32.totalorder %s28, 0
      %p243 = por %p241, %p242
      %p244 = scmp.ne.s32.totalorder %s230, %s231
      %p245 = scmp.eq.s32.totalorder %s29, 1
      %p246 = por %p244, %p245
      %p248 = scmp.ne.s32.totalorder %s231, %s247
      %p249 = scmp.eq.s32.totalorder %s29, 0
      %p250 = por %p248, %p249
      %p251 = scmp.le.s32.totalorder 1, %s23
      %p252 = scmp.lt.s32.totalorder %s23, 3
      %p253 = pnand %p251, %p252
      %p254 = pneg %p253
      // Predicated region
      $region9: #{tpu_custom_call.1} parent=5 // pred_check
        _
      $region10: #{tpu_custom_call.1} parent=5 // pred_check_branch
        %256 = sbr.rel (%p253) target = $region12
      $region11: #{tpu_custom_call.1} parent=5 // pred_region
        %s257 = ssub.s32 %s23, 1
        // Predicated region
        $region13: #{tpu_custom_call.1} parent=11 // pred_check
          %p258 = pneg %p70
        $region14: #{tpu_custom_call.1} parent=11 // pred_check_branch
          %260 = sbr.rel (%p258) target = $region16
        $region15: #{tpu_custom_call.1} parent=11 // pred_region
          %262 = vsyncadd [#allocation6], 0
          %s263 = sshll.u32 %s1, 4
          %s264 = int_to_ptr.hbm [resolvable:$true] %s263
          %s265 = sshll.u32 [#allocation5], 4
          %s266 = int_to_ptr.vmem [resolvable:$true] %s265
          %271 = dma.hbm_to_vmem [thread:$0]  %s264, 2048, %s266, [#allocation6], 64, 64, 4
        $region16: #{tpu_custom_call.1} parent=11 // pred_fallthru
          _
        // Predicated region
        $region17: #{tpu_custom_call.1} parent=11 // pred_check
          %p272 = pneg %p91
        $region18: #{tpu_custom_call.1} parent=11 // pred_check_branch
          %274 = sbr.rel (%p272) target = $region20
        $region19: #{tpu_custom_call.1} parent=11 // pred_region
          _
        $region20: #{tpu_custom_call.1} parent=11 // pred_fallthru
          _
        // Predicated region
        $region21: #{tpu_custom_call.1} parent=11 // pred_check
          %p275 = pneg %p112
        $region22: #{tpu_custom_call.1} parent=11 // pred_check_branch
          %277 = sbr.rel (%p275) target = $region24
        $region23: #{tpu_custom_call.1} parent=11 // pred_region
          %279 = vsyncadd [#allocation6], 0
          %s280 = sshll.u32 %s3, 4
          %s281 = int_to_ptr.hbm [resolvable:$true] %s280
          %s282 = sshll.u32 [#allocation7], 4
          %s283 = int_to_ptr.vmem [resolvable:$true] %s282
          %288 = dma.hbm_to_vmem [thread:$0]  %s281, 1024, %s283, [#allocation6], 64, 64, 4
        $region24: #{tpu_custom_call.1} parent=11 // pred_fallthru
          _
        // Predicated region
        $region25: #{tpu_custom_call.1} parent=11 // pred_check
          %p289 = pneg %p133
        $region26: #{tpu_custom_call.1} parent=11 // pred_check_branch
          %291 = sbr.rel (%p289) target = $region28
        $region27: #{tpu_custom_call.1} parent=11 // pred_region
          _
        $region28: #{tpu_custom_call.1} parent=11 // pred_fallthru
          _
        // Predicated region
        $region29: #{tpu_custom_call.1} parent=11 // pred_check
          %p292 = pneg %p154
        $region30: #{tpu_custom_call.1} parent=11 // pred_check_branch
          %294 = sbr.rel (%p292) target = $region32
        $region31: #{tpu_custom_call.1} parent=11 // pred_region
          %296 = vsyncadd [#allocation9], 0
          %s297 = sshll.u32 %s5, 4
          %s298 = int_to_ptr.hbm [resolvable:$true] %s297
          %s299 = sshll.u32 [#allocation8], 4
          %s300 = int_to_ptr.vmem [resolvable:$true] %s299
          %305 = dma.hbm_to_vmem [thread:$0]  %s298, 1024, %s300, [#allocation9], 64, 64, 4
        $region32: #{tpu_custom_call.1} parent=11 // pred_fallthru
          _
        // Predicated region
        $region33: #{tpu_custom_call.1} parent=11 // pred_check
          %p306 = pneg %p175
        $region34: #{tpu_custom_call.1} parent=11 // pred_check_branch
          %308 = sbr.rel (%p306) target = $region36
        $region35: #{tpu_custom_call.1} parent=11 // pred_region
          _
        $region36: #{tpu_custom_call.1} parent=11 // pred_fallthru
          _
        // Predicated region
        $region37: #{tpu_custom_call.1} parent=11 // pred_check
          %p309 = pneg %p196
        $region38: #{tpu_custom_call.1} parent=11 // pred_check_branch
          %311 = sbr.rel (%p309) target = $region40
        $region39: #{tpu_custom_call.1} parent=11 // pred_region
          %313 = vsyncadd [#allocation9], 0
          %s314 = sshll.u32 %s7, 4
          %s315 = int_to_ptr.hbm [resolvable:$true] %s314
          %s316 = sshll.u32 [#allocation10], 4
          %s317 = int_to_ptr.vmem [resolvable:$true] %s316
          %322 = dma.hbm_to_vmem [thread:$0]  %s315, 1024, %s317, [#allocation9], 64, 64, 4
        $region40: #{tpu_custom_call.1} parent=11 // pred_fallthru
          _
        // Predicated region
        $region41: #{tpu_custom_call.1} parent=11 // pred_check
          %p323 = pneg %p217
        $region42: #{tpu_custom_call.1} parent=11 // pred_check_branch
          %325 = sbr.rel (%p323) target = $region44
        $region43: #{tpu_custom_call.1} parent=11 // pred_region
          _
        $region44: #{tpu_custom_call.1} parent=11 // pred_fallthru
          _
      $region12: #{tpu_custom_call.1} parent=5 // pred_fallthru
        _
      %p326 = scmp.lt.s32.totalorder %s23, 2
      // Predicated region
      $region45: #{tpu_custom_call.1} parent=5 // pred_check
        %p327 = pneg %p326
      $region46: #{tpu_custom_call.1} parent=5 // pred_check_branch
        %329 = sbr.rel (%p327) target = $region48
      $region47: #{tpu_custom_call.1} parent=5 // pred_region
        // Predicated region
        $region49: #{tpu_custom_call.1} parent=47 // pred_check
          %p330 = pneg %p43
        $region50: #{tpu_custom_call.1} parent=47 // pred_check_branch
          %332 = sbr.rel (%p330) target = $region52
        $region51: #{tpu_custom_call.1} parent=47 // pred_region
          %s333 = sand.u32 %s33, 1
          %s334 = scalar_lea.sflag [#allocation3], %s333
          %s335 = sand.u32 %s33, 1
          %s336 = smul.addr %s335, 224
          %s337 = scalar_lea.vmem [#allocation2], %s336
          %s338 = smul.u32 14, %s23
          %s339 = ssub.s32 25, %s338
          %p340 = scmp.lt.s32.totalorder %s339, 14
          %s341 = scalar_select %p340, %s339, 14
          %s342 = smul.u32 8, %s341
          %s343 = smul.u32 %s342, 2
          %s344 = ssub.s32 224, %s343
          %s345 = sshll.u32 %s344, 4
          %346 = vsyncadd %s334, %s345
          %p347 = scmp.ne.s32.totalorder 0, %s343
          %s348 = smul.addr %s338, 2
          %s349 = smul.addr %s348, 8
          %s350 = scalar_lea.hbm %s0, %s349
          %s351 = smul.u32 16, %s341
          %s352 = sshll.u32 %s350, 4
          %s353 = int_to_ptr.hbm [resolvable:$true] %s352
          %s354 = sshll.u32 %s337, 4
          %s355 = int_to_ptr.vmem [resolvable:$true] %s354
          %s356 = sshll.u32 %s351, 4
          %360 = dma.hbm_to_vmem [thread:$0]  (%p347), %s353, %s356, %s355, %s334, 256, 256, 16
        $region52: #{tpu_custom_call.1} parent=47 // pred_fallthru
          _
      $region48: #{tpu_custom_call.1} parent=5 // pred_fallthru
        _
      %p361 = scmp.le.s32.totalorder 1, %s23
      %p362 = scmp.lt.s32.totalorder %s23, 3
      %p363 = pnand %p361, %p362
      %p364 = pneg %p363
      // Predicated region
      $region53: #{tpu_custom_call.1} parent=5 // pred_check
        _
      $region54: #{tpu_custom_call.1} parent=5 // pred_check_branch
        %366 = sbr.rel (%p363) target = $region56
      $region55: #{tpu_custom_call.1} parent=5 // pred_region
        %s367 = ssub.s32 %s23, 1
        %s368 = sand.u32 %s36, 1
        %s369 = scalar_lea.sflag [#allocation3], %s368
        %s370 = sand.u32 %s36, 1
        %s371 = smul.addr %s370, 224
        %s372 = scalar_lea.vmem [#allocation2], %s371
        // Predicated region
        $region57: #{tpu_custom_call.1} parent=55 // pred_check
          %p373 = pneg %p49
        $region58: #{tpu_custom_call.1} parent=55 // pred_check_branch
          %375 = sbr.rel (%p373) target = $region60
        $region59: #{tpu_custom_call.1} parent=55 // pred_region
          %377 = dma.done %s369, 3584
        $region60: #{tpu_custom_call.1} parent=55 // pred_fallthru
          _
        // Predicated region
        $region61: #{tpu_custom_call.1} parent=55 // pred_check
          %p378 = pneg %p70
        $region62: #{tpu_custom_call.1} parent=55 // pred_check_branch
          %380 = sbr.rel (%p378) target = $region64
        $region63: #{tpu_custom_call.1} parent=55 // pred_region
          %382 = dma.done [#allocation6], 2048
        $region64: #{tpu_custom_call.1} parent=55 // pred_fallthru
          _
        // Predicated region
        $region65: #{tpu_custom_call.1} parent=55 // pred_check
          %p383 = pneg %p112
        $region66: #{tpu_custom_call.1} parent=55 // pred_check_branch
          %385 = sbr.rel (%p383) target = $region68
        $region67: #{tpu_custom_call.1} parent=55 // pred_region
          %387 = dma.done [#allocation6], 1024
        $region68: #{tpu_custom_call.1} parent=55 // pred_fallthru
          _
        // Predicated region
        $region69: #{tpu_custom_call.1} parent=55 // pred_check
          %p388 = pneg %p154
        $region70: #{tpu_custom_call.1} parent=55 // pred_check_branch
          %390 = sbr.rel (%p388) target = $region72
        $region71: #{tpu_custom_call.1} parent=55 // pred_region
          %392 = dma.done [#allocation9], 1024
        $region72: #{tpu_custom_call.1} parent=55 // pred_fallthru
          _
        // Predicated region
        $region73: #{tpu_custom_call.1} parent=55 // pred_check
          %p393 = pneg %p196
        $region74: #{tpu_custom_call.1} parent=55 // pred_check_branch
          %395 = sbr.rel (%p393) target = $region76
        $region75: #{tpu_custom_call.1} parent=55 // pred_region
          %397 = dma.done [#allocation9], 1024
        $region76: #{tpu_custom_call.1} parent=55 // pred_fallthru
          _
        %s398 = sand.u32 %s36, 1
        %s399 = scalar_lea.sflag [#allocation3], %s398
        %s400 = sand.u32 %s36, 1
        %s401 = smul.addr %s400, 224
        %s402 = scalar_lea.vmem [#allocation2], %s401
        %p403 = pneg %p49
        %p404 = pneg %p46
        %p405 = pneg %p70
        %p406 = pneg %p67
        %p407 = pneg %p91
        %p408 = pneg %p88
        %p409 = pneg %p112
        %p410 = pneg %p109
        %p411 = pneg %p133
        %p412 = pneg %p130
        %p413 = pneg %p154
        %p414 = pneg %p151
        %p415 = pneg %p175
        %p416 = pneg %p172
        %p417 = pneg %p196
        %p418 = pneg %p193
        %p419 = pneg %p217
        %p420 = pneg %p214
        %p421 = pneg %p243
        %p422 = pneg %p240
        %s423 = sand.u32 %s230, 1
        %s424 = scalar_lea.sflag [#allocation4], %s423
        %s425 = sand.u32 %s230, 1
        %s426 = smul.addr %s425, 112
        %s427 = scalar_lea.vmem [#allocation11], %s426
        %s428 = smul.u32 14, %s28
        %s429 = ssub.s32 25, %s428
        %p430 = scmp.lt.s32.totalorder %s429, 14
        %s431 = scalar_select %p430, %s429, 14
        %s432 = smul.u32 8, %s431
        %s433 = smul.u32 %s432, 2
        %s434 = smul.u32 14, %s28
        %s435 = ssub.s32 25, %s434
        %p436 = scmp.lt.s32.totalorder %s435, 14
        %s437 = scalar_select %p436, %s435, 14
        %s438 = smul.u32 8, %s437
        %v439 = vld [vmem:[%s372] sm:$0xff]
        %v440 = vld [vmem:[%s372 + $0x8] sm:$0xff]
        %v441 = vld [vmem:[%s372 + $0x10] sm:$0xff]
        %v442 = vld [vmem:[%s372 + $0x18] sm:$0xff]
        %v443 = vld [vmem:[%s372 + $0x20] sm:$0xff]
        %v444 = vld [vmem:[%s372 + $0x28] sm:$0xff]
        %v445 = vld [vmem:[%s372 + $0x30] sm:$0xff]
        %v446 = vld [vmem:[%s372 + $0x38] sm:$0xff]
        %v447 = vld [vmem:[%s372 + $0x40] sm:$0xff]
        %v448 = vld [vmem:[%s372 + $0x48] sm:$0xff]
        %v449 = vld [vmem:[%s372 + $0x50] sm:$0xff]
        %v450 = vld [vmem:[%s372 + $0x58] sm:$0xff]
        %v451 = vld [vmem:[%s372 + $0x60] sm:$0xff]
        %v452 = vld [vmem:[%s372 + $0x68] sm:$0xff]
        %v453 = vld [vmem:[%s372 + $0x70] sm:$0xff]
        %v454 = vld [vmem:[%s372 + $0x78] sm:$0xff]
        %v455 = vld [vmem:[%s372 + $0x80] sm:$0xff]
        %v456 = vld [vmem:[%s372 + $0x88] sm:$0xff]
        %v457 = vld [vmem:[%s372 + $0x90] sm:$0xff]
        %v458 = vld [vmem:[%s372 + $0x98] sm:$0xff]
        %v459 = vld [vmem:[%s372 + $0xa0] sm:$0xff]
        %v460 = vld [vmem:[%s372 + $0xa8] sm:$0xff]
        %v461 = vld [vmem:[%s372 + $0xb0] sm:$0xff]
        %v462 = vld [vmem:[%s372 + $0xb8] sm:$0xff]
        %v463 = vld [vmem:[%s372 + $0xc0] sm:$0xff]
        %v464 = vld [vmem:[%s372 + $0xc8] sm:$0xff]
        %v465 = vld [vmem:[%s372 + $0xd0] sm:$0xff]
        %v466 = vld [vmem:[%s372 + $0xd8] sm:$0xff]
        %v467 = vpack.c.bf16 %v441, %v439
        %v468 = vpack.c.bf16 %v442, %v440
        %v469 = vpack.c.bf16 %v445, %v443
        %v470 = vpack.c.bf16 %v446, %v444
        %v471 = vpack.c.bf16 %v449, %v447
        %v472 = vpack.c.bf16 %v450, %v448
        %v473 = vpack.c.bf16 %v453, %v451
        %v474 = vpack.c.bf16 %v454, %v452
        %v475 = vpack.c.bf16 %v457, %v455
        %v476 = vpack.c.bf16 %v458, %v456
        %v477 = vpack.c.bf16 %v461, %v459
        %v478 = vpack.c.bf16 %v462, %v460
        %v479 = vpack.c.bf16 %v465, %v463
        %v480 = vpack.c.bf16 %v466, %v464
        %v481 = vld [vmem:[#allocation5] sm:$0xf]
        %v482 = vld [vmem:[#allocation5 + $0x4] sm:$0xf]
        %v483 = vld [vmem:[#allocation5 + $0x8] sm:$0xf]
        %v484 = vld [vmem:[#allocation5 + $0xc] sm:$0xf]
        %v485 = vld [vmem:[#allocation5 + $0x10] sm:$0xf]
        %v486 = vld [vmem:[#allocation5 + $0x14] sm:$0xf]
        %v487 = vld [vmem:[#allocation5 + $0x18] sm:$0xf]
        %v488 = vld [vmem:[#allocation5 + $0x1c] sm:$0xf]
        %v489 = vld [vmem:[#allocation5 + $0x20] sm:$0xf]
        %v490 = vld [vmem:[#allocation5 + $0x24] sm:$0xf]
        %v491 = vld [vmem:[#allocation5 + $0x28] sm:$0xf]
        %v492 = vld [vmem:[#allocation5 + $0x2c] sm:$0xf]
        %v493 = vld [vmem:[#allocation5 + $0x30] sm:$0xf]
        %v494 = vld [vmem:[#allocation5 + $0x34] sm:$0xf]
        %v495 = vld [vmem:[#allocation5 + $0x38] sm:$0xf]
        %v496 = vld [vmem:[#allocation5 + $0x3c] sm:$0xf]
        %v497 = vld [vmem:[#allocation5 + $0x40] sm:$0xf]
        %v498 = vld [vmem:[#allocation5 + $0x44] sm:$0xf]
        %v499 = vld [vmem:[#allocation5 + $0x48] sm:$0xf]
        %v500 = vld [vmem:[#allocation5 + $0x4c] sm:$0xf]
        %v501 = vld [vmem:[#allocation5 + $0x50] sm:$0xf]
        %v502 = vld [vmem:[#allocation5 + $0x54] sm:$0xf]
        %v503 = vld [vmem:[#allocation5 + $0x58] sm:$0xf]
        %v504 = vld [vmem:[#allocation5 + $0x5c] sm:$0xf]
        %v505 = vld [vmem:[#allocation5 + $0x60] sm:$0xf]
        %v506 = vld [vmem:[#allocation5 + $0x64] sm:$0xf]
        %v507 = vld [vmem:[#allocation5 + $0x68] sm:$0xf]
        %v508 = vld [vmem:[#allocation5 + $0x6c] sm:$0xf]
        %v509 = vld [vmem:[#allocation5 + $0x70] sm:$0xf]
        %v510 = vld [vmem:[#allocation5 + $0x74] sm:$0xf]
        %v511 = vld [vmem:[#allocation5 + $0x78] sm:$0xf]
        %v512 = vld [vmem:[#allocation5 + $0x7c] sm:$0xf]
        %v513 = vld [vmem:[%s2] sm:$0x1]
        %v515 = vperm.slane %v513, 0
        %v549 = vunpack.c.l.b16 %v481
        %v550 = vunpack.c.l.b16 %v482
        %v551 = vunpack.c.l.b16 %v483
        %v552 = vunpack.c.l.b16 %v484
        %v553 = vunpack.c.l.b16 %v485
        %v554 = vunpack.c.l.b16 %v486
        %v555 = vunpack.c.l.b16 %v487
        %v556 = vunpack.c.l.b16 %v488
        %v557 = vunpack.c.l.b16 %v489
        %v558 = vunpack.c.l.b16 %v490
        %v559 = vunpack.c.l.b16 %v491
        %v560 = vunpack.c.l.b16 %v492
        %v561 = vunpack.c.l.b16 %v493
        %v562 = vunpack.c.l.b16 %v494
        %v563 = vunpack.c.l.b16 %v495
        %v564 = vunpack.c.l.b16 %v496
        %v565 = vunpack.c.l.b16 %v497
        %v566 = vunpack.c.l.b16 %v498
        %v567 = vunpack.c.l.b16 %v499
        %v568 = vunpack.c.l.b16 %v500
        %v569 = vunpack.c.l.b16 %v501
        %v570 = vunpack.c.l.b16 %v502
        %v571 = vunpack.c.l.b16 %v503
        %v572 = vunpack.c.l.b16 %v504
        %v573 = vunpack.c.l.b16 %v505
        %v574 = vunpack.c.l.b16 %v506
        %v575 = vunpack.c.l.b16 %v507
        %v576 = vunpack.c.l.b16 %v508
        %v577 = vunpack.c.l.b16 %v509
        %v578 = vunpack.c.l.b16 %v510
        %v579 = vunpack.c.l.b16 %v511
        %v580 = vunpack.c.l.b16 %v512
        %v581 = vpack.c.b16 %v550, %v549
        %v582 = vpack.c.b16 %v552, %v551
        %v583 = vpack.c.b16 %v554, %v553
        %v584 = vpack.c.b16 %v556, %v555
        %v585 = vpack.c.b16 %v558, %v557
        %v586 = vpack.c.b16 %v560, %v559
        %v587 = vpack.c.b16 %v562, %v561
        %v588 = vpack.c.b16 %v564, %v563
        %v589 = vpack.c.b16 %v566, %v565
        %v590 = vpack.c.b16 %v568, %v567
        %v591 = vpack.c.b16 %v570, %v569
        %v592 = vpack.c.b16 %v572, %v571
        %v593 = vpack.c.b16 %v574, %v573
        %v594 = vpack.c.b16 %v576, %v575
        %v595 = vpack.c.b16 %v578, %v577
        %v596 = vpack.c.b16 %v580, %v579
        %613 = vmatpush.bf16.msra.mxu0 %v588
        %614 = vmatpush.bf16.msra.mxu0 %v587
        %615 = vmatpush.bf16.msra.mxu0 %v586
        %616 = vmatpush.bf16.msra.mxu0 %v585
        %617 = vmatpush.bf16.msra.mxu0 %v584
        %618 = vmatpush.bf16.msra.mxu0 %v583
        %619 = vmatpush.bf16.msra.mxu0 %v582
        %620 = vmatpush.bf16.msra.mxu0 %v581
        %621 = vmatmul.bf16.gmra.mxu0 %v467
        %v622 = vpop.f32.mrf.mxu0
        %v623 = vadd.f32 %v515, %v622
        %v624 = vpop.f32.mrf.mxu0
        %v625 = vadd.f32 %v515, %v624
        %626 = vmatmul.bf16.gmra.mxu0 %v469
        %v627 = vpop.f32.mrf.mxu0
        %v628 = vadd.f32 %v515, %v627
        %v629 = vpop.f32.mrf.mxu0
        %v630 = vadd.f32 %v515, %v629
        %631 = vmatmul.bf16.gmra.mxu0 %v471
        %v632 = vpop.f32.mrf.mxu0
        %v633 = vadd.f32 %v515, %v632
        %v634 = vpop.f32.mrf.mxu0
        %v635 = vadd.f32 %v515, %v634
        %636 = vmatmul.bf16.gmra.mxu0 %v473
        %v637 = vpop.f32.mrf.mxu0
        %v638 = vadd.f32 %v515, %v637
        %v639 = vpop.f32.mrf.mxu0
        %v640 = vadd.f32 %v515, %v639
        %641 = vmatmul.bf16.gmra.mxu0 %v475
        %v642 = vpop.f32.mrf.mxu0
        %v643 = vadd.f32 %v515, %v642
        %v644 = vpop.f32.mrf.mxu0
        %v645 = vadd.f32 %v515, %v644
        %646 = vmatmul.bf16.gmra.mxu0 %v477
        %v647 = vpop.f32.mrf.mxu0
        %v648 = vadd.f32 %v515, %v647
        %v649 = vpop.f32.mrf.mxu0
        %v650 = vadd.f32 %v515, %v649
        %651 = vmatmul.bf16.gmra.mxu0 %v479
        %v652 = vpop.f32.mrf.mxu0
        %v653 = vadd.f32 %v515, %v652
        %v654 = vpop.f32.mrf.mxu0
        %v655 = vadd.f32 %v515, %v654
        %656 = vdwg.mxu0
        %657 = vmatpush.bf16.msra.mxu0 %v596
        %658 = vmatpush.bf16.msra.mxu0 %v595
        %659 = vmatpush.bf16.msra.mxu0 %v594
        %660 = vmatpush.bf16.msra.mxu0 %v593
        %661 = vmatpush.bf16.msra.mxu0 %v592
        %662 = vmatpush.bf16.msra.mxu0 %v591
        %663 = vmatpush.bf16.msra.mxu0 %v590
        %664 = vmatpush.bf16.msra.mxu0 %v589
        %665 = vmatmul.bf16.gmra.mxu0 %v468
        %v666 = vpop.f32.mrf.mxu0
        %v667 = vadd.f32 %v623, %v666
        %v668 = vpop.f32.mrf.mxu0
        %v669 = vadd.f32 %v625, %v668
        %670 = vmatmul.bf16.gmra.mxu0 %v470
        %v671 = vpop.f32.mrf.mxu0
        %v672 = vadd.f32 %v628, %v671
        %v673 = vpop.f32.mrf.mxu0
        %v674 = vadd.f32 %v630, %v673
        %675 = vmatmul.bf16.gmra.mxu0 %v472
        %v676 = vpop.f32.mrf.mxu0
        %v677 = vadd.f32 %v633, %v676
        %v678 = vpop.f32.mrf.mxu0
        %v679 = vadd.f32 %v635, %v678
        %680 = vmatmul.bf16.gmra.mxu0 %v474
        %v681 = vpop.f32.mrf.mxu0
        %v682 = vadd.f32 %v638, %v681
        %v683 = vpop.f32.mrf.mxu0
        %v684 = vadd.f32 %v640, %v683
        %685 = vmatmul.bf16.gmra.mxu0 %v476
        %v686 = vpop.f32.mrf.mxu0
        %v687 = vadd.f32 %v643, %v686
        %v688 = vpop.f32.mrf.mxu0
        %v689 = vadd.f32 %v645, %v688
        %690 = vmatmul.bf16.gmra.mxu0 %v478
        %v691 = vpop.f32.mrf.mxu0
        %v692 = vadd.f32 %v648, %v691
        %v693 = vpop.f32.mrf.mxu0
        %v694 = vadd.f32 %v650, %v693
        %695 = vmatmul.bf16.gmra.mxu0 %v480
        %v696 = vpop.f32.mrf.mxu0
        %v697 = vadd.f32 %v653, %v696
        %v698 = vpop.f32.mrf.mxu0
        %v699 = vadd.f32 %v655, %v698
        %700 = vdwg.mxu0
        %v701 = vmax.f32 %v667, 0.0
        %v702 = vmax.f32 %v669, 0.0
        %v703 = vmax.f32 %v672, 0.0
        %v704 = vmax.f32 %v674, 0.0
        %v705 = vmax.f32 %v677, 0.0
        %v706 = vmax.f32 %v679, 0.0
        %v707 = vmax.f32 %v682, 0.0
        %v708 = vmax.f32 %v684, 0.0
        %v709 = vmax.f32 %v687, 0.0
        %v710 = vmax.f32 %v689, 0.0
        %v711 = vmax.f32 %v692, 0.0
        %v712 = vmax.f32 %v694, 0.0
        %v713 = vmax.f32 %v697, 0.0
        %v714 = vmax.f32 %v699, 0.0
        %v715 = vpack.c.bf16 %v702, %v701
        %v716 = vpack.c.bf16 %v704, %v703
        %v717 = vpack.c.bf16 %v706, %v705
        %v718 = vpack.c.bf16 %v708, %v707
        %v719 = vpack.c.bf16 %v710, %v709
        %v720 = vpack.c.bf16 %v712, %v711
        %v721 = vpack.c.bf16 %v714, %v713
        %v722 = vld [vmem:[#allocation7] sm:$0xf]
        %v723 = vld [vmem:[#allocation7 + $0x4] sm:$0xf]
        %v724 = vld [vmem:[#allocation7 + $0x8] sm:$0xf]
        %v725 = vld [vmem:[#allocation7 + $0xc] sm:$0xf]
        %v726 = vld [vmem:[#allocation7 + $0x10] sm:$0xf]
        %v727 = vld [vmem:[#allocation7 + $0x14] sm:$0xf]
        %v728 = vld [vmem:[#allocation7 + $0x18] sm:$0xf]
        %v729 = vld [vmem:[#allocation7 + $0x1c] sm:$0xf]
        %v730 = vld [vmem:[#allocation7 + $0x20] sm:$0xf]
        %v731 = vld [vmem:[#allocation7 + $0x24] sm:$0xf]
        %v732 = vld [vmem:[#allocation7 + $0x28] sm:$0xf]
        %v733 = vld [vmem:[#allocation7 + $0x2c] sm:$0xf]
        %v734 = vld [vmem:[#allocation7 + $0x30] sm:$0xf]
        %v735 = vld [vmem:[#allocation7 + $0x34] sm:$0xf]
        %v736 = vld [vmem:[#allocation7 + $0x38] sm:$0xf]
        %v737 = vld [vmem:[#allocation7 + $0x3c] sm:$0xf]
        %v738 = vld [vmem:[%s4] sm:$0x1]
        %v740 = vperm.slane %v738, 0
        %v758 = vunpack.c.l.b16 %v722
        %v759 = vunpack.c.l.b16 %v723
        %v760 = vunpack.c.l.b16 %v724
        %v761 = vunpack.c.l.b16 %v725
        %v762 = vunpack.c.l.b16 %v726
        %v763 = vunpack.c.l.b16 %v727
        %v764 = vunpack.c.l.b16 %v728
        %v765 = vunpack.c.l.b16 %v729
        %v766 = vunpack.c.l.b16 %v730
        %v767 = vunpack.c.l.b16 %v731
        %v768 = vunpack.c.l.b16 %v732
        %v769 = vunpack.c.l.b16 %v733
        %v770 = vunpack.c.l.b16 %v734
        %v771 = vunpack.c.l.b16 %v735
        %v772 = vunpack.c.l.b16 %v736
        %v773 = vunpack.c.l.b16 %v737
        %v774 = vpack.c.b16 %v759, %v758
        %v775 = vpack.c.b16 %v761, %v760
        %v776 = vpack.c.b16 %v763, %v762
        %v777 = vpack.c.b16 %v765, %v764
        %v778 = vpack.c.b16 %v767, %v766
        %v779 = vpack.c.b16 %v769, %v768
        %v780 = vpack.c.b16 %v771, %v770
        %v781 = vpack.c.b16 %v773, %v772
        %790 = vmatpush.bf16.msra.mxu0 %v781
        %791 = vmatpush.bf16.msra.mxu0 %v780
        %792 = vmatpush.bf16.msra.mxu0 %v779
        %793 = vmatpush.bf16.msra.mxu0 %v778
        %794 = vmatpush.bf16.msra.mxu0 %v777
        %795 = vmatpush.bf16.msra.mxu0 %v776
        %796 = vmatpush.bf16.msra.mxu0 %v775
        %797 = vmatpush.bf16.msra.mxu0 %v774
        %798 = vmatmul.bf16.gmra.mxu0 %v715
        %v799 = vpop.f32.mrf.mxu0
        %v800 = vadd.f32 %v740, %v799
        %v801 = vpop.f32.mrf.mxu0
        %v802 = vadd.f32 %v740, %v801
        %803 = vmatmul.bf16.gmra.mxu0 %v716
        %v804 = vpop.f32.mrf.mxu0
        %v805 = vadd.f32 %v740, %v804
        %v806 = vpop.f32.mrf.mxu0
        %v807 = vadd.f32 %v740, %v806
        %808 = vmatmul.bf16.gmra.mxu0 %v717
        %v809 = vpop.f32.mrf.mxu0
        %v810 = vadd.f32 %v740, %v809
        %v811 = vpop.f32.mrf.mxu0
        %v812 = vadd.f32 %v740, %v811
        %813 = vmatmul.bf16.gmra.mxu0 %v718
        %v814 = vpop.f32.mrf.mxu0
        %v815 = vadd.f32 %v740, %v814
        %v816 = vpop.f32.mrf.mxu0
        %v817 = vadd.f32 %v740, %v816
        %818 = vmatmul.bf16.gmra.mxu0 %v719
        %v819 = vpop.f32.mrf.mxu0
        %v820 = vadd.f32 %v740, %v819
        %v821 = vpop.f32.mrf.mxu0
        %v822 = vadd.f32 %v740, %v821
        %823 = vmatmul.bf16.gmra.mxu0 %v720
        %v824 = vpop.f32.mrf.mxu0
        %v825 = vadd.f32 %v740, %v824
        %v826 = vpop.f32.mrf.mxu0
        %v827 = vadd.f32 %v740, %v826
        %828 = vmatmul.bf16.gmra.mxu0 %v721
        %v829 = vpop.f32.mrf.mxu0
        %v830 = vadd.f32 %v740, %v829
        %v831 = vpop.f32.mrf.mxu0
        %v832 = vadd.f32 %v740, %v831
        %833 = vdwg.mxu0
        %v834 = vmax.f32 %v800, 0.0
        %v835 = vmax.f32 %v802, 0.0
        %v836 = vmax.f32 %v805, 0.0
        %v837 = vmax.f32 %v807, 0.0
        %v838 = vmax.f32 %v810, 0.0
        %v839 = vmax.f32 %v812, 0.0
        %v840 = vmax.f32 %v815, 0.0
        %v841 = vmax.f32 %v817, 0.0
        %v842 = vmax.f32 %v820, 0.0
        %v843 = vmax.f32 %v822, 0.0
        %v844 = vmax.f32 %v825, 0.0
        %v845 = vmax.f32 %v827, 0.0
        %v846 = vmax.f32 %v830, 0.0
        %v847 = vmax.f32 %v832, 0.0
        %v848 = vpack.c.bf16 %v835, %v834
        %v849 = vpack.c.bf16 %v837, %v836
        %v850 = vpack.c.bf16 %v839, %v838
        %v851 = vpack.c.bf16 %v841, %v840
        %v852 = vpack.c.bf16 %v843, %v842
        %v853 = vpack.c.bf16 %v845, %v844
        %v854 = vpack.c.bf16 %v847, %v846
        %v855 = vld [vmem:[#allocation8] sm:$0xf]
        %v856 = vld [vmem:[#allocation8 + $0x4] sm:$0xf]
        %v857 = vld [vmem:[#allocation8 + $0x8] sm:$0xf]
        %v858 = vld [vmem:[#allocation8 + $0xc] sm:$0xf]
        %v859 = vld [vmem:[#allocation8 + $0x10] sm:$0xf]
        %v860 = vld [vmem:[#allocation8 + $0x14] sm:$0xf]
        %v861 = vld [vmem:[#allocation8 + $0x18] sm:$0xf]
        %v862 = vld [vmem:[#allocation8 + $0x1c] sm:$0xf]
        %v863 = vld [vmem:[#allocation8 + $0x20] sm:$0xf]
        %v864 = vld [vmem:[#allocation8 + $0x24] sm:$0xf]
        %v865 = vld [vmem:[#allocation8 + $0x28] sm:$0xf]
        %v866 = vld [vmem:[#allocation8 + $0x2c] sm:$0xf]
        %v867 = vld [vmem:[#allocation8 + $0x30] sm:$0xf]
        %v868 = vld [vmem:[#allocation8 + $0x34] sm:$0xf]
        %v869 = vld [vmem:[#allocation8 + $0x38] sm:$0xf]
        %v870 = vld [vmem:[#allocation8 + $0x3c] sm:$0xf]
        %v871 = vld [vmem:[%s6] sm:$0x1]
        %v873 = vperm.slane %v871, 0
        %v891 = vunpack.c.l.b16 %v855
        %v892 = vunpack.c.l.b16 %v856
        %v893 = vunpack.c.l.b16 %v857
        %v894 = vunpack.c.l.b16 %v858
        %v895 = vunpack.c.l.b16 %v859
        %v896 = vunpack.c.l.b16 %v860
        %v897 = vunpack.c.l.b16 %v861
        %v898 = vunpack.c.l.b16 %v862
        %v899 = vunpack.c.l.b16 %v863
        %v900 = vunpack.c.l.b16 %v864
        %v901 = vunpack.c.l.b16 %v865
        %v902 = vunpack.c.l.b16 %v866
        %v903 = vunpack.c.l.b16 %v867
        %v904 = vunpack.c.l.b16 %v868
        %v905 = vunpack.c.l.b16 %v869
        %v906 = vunpack.c.l.b16 %v870
        %v907 = vpack.c.b16 %v892, %v891
        %v908 = vpack.c.b16 %v894, %v893
        %v909 = vpack.c.b16 %v896, %v895
        %v910 = vpack.c.b16 %v898, %v897
        %v911 = vpack.c.b16 %v900, %v899
        %v912 = vpack.c.b16 %v902, %v901
        %v913 = vpack.c.b16 %v904, %v903
        %v914 = vpack.c.b16 %v906, %v905
        %923 = vmatpush.bf16.msra.mxu0 %v914
        %924 = vmatpush.bf16.msra.mxu0 %v913
        %925 = vmatpush.bf16.msra.mxu0 %v912
        %926 = vmatpush.bf16.msra.mxu0 %v911
        %927 = vmatpush.bf16.msra.mxu0 %v910
        %928 = vmatpush.bf16.msra.mxu0 %v909
        %929 = vmatpush.bf16.msra.mxu0 %v908
        %930 = vmatpush.bf16.msra.mxu0 %v907
        %931 = vmatmul.bf16.gmra.mxu0 %v848
        %v932 = vpop.f32.mrf.mxu0
        %v933 = vadd.f32 %v873, %v932
        %v934 = vpop.f32.mrf.mxu0
        %v935 = vadd.f32 %v873, %v934
        %936 = vmatmul.bf16.gmra.mxu0 %v849
        %v937 = vpop.f32.mrf.mxu0
        %v938 = vadd.f32 %v873, %v937
        %v939 = vpop.f32.mrf.mxu0
        %v940 = vadd.f32 %v873, %v939
        %941 = vmatmul.bf16.gmra.mxu0 %v850
        %v942 = vpop.f32.mrf.mxu0
        %v943 = vadd.f32 %v873, %v942
        %v944 = vpop.f32.mrf.mxu0
        %v945 = vadd.f32 %v873, %v944
        %946 = vmatmul.bf16.gmra.mxu0 %v851
        %v947 = vpop.f32.mrf.mxu0
        %v948 = vadd.f32 %v873, %v947
        %v949 = vpop.f32.mrf.mxu0
        %v950 = vadd.f32 %v873, %v949
        %951 = vmatmul.bf16.gmra.mxu0 %v852
        %v952 = vpop.f32.mrf.mxu0
        %v953 = vadd.f32 %v873, %v952
        %v954 = vpop.f32.mrf.mxu0
        %v955 = vadd.f32 %v873, %v954
        %956 = vmatmul.bf16.gmra.mxu0 %v853
        %v957 = vpop.f32.mrf.mxu0
        %v958 = vadd.f32 %v873, %v957
        %v959 = vpop.f32.mrf.mxu0
        %v960 = vadd.f32 %v873, %v959
        %961 = vmatmul.bf16.gmra.mxu0 %v854
        %v962 = vpop.f32.mrf.mxu0
        %v963 = vadd.f32 %v873, %v962
        %v964 = vpop.f32.mrf.mxu0
        %v965 = vadd.f32 %v873, %v964
        %966 = vdwg.mxu0
        %v967 = vmax.f32 %v933, 0.0
        %v968 = vmax.f32 %v935, 0.0
        %v969 = vmax.f32 %v938, 0.0
        %v970 = vmax.f32 %v940, 0.0
        %v971 = vmax.f32 %v943, 0.0
        %v972 = vmax.f32 %v945, 0.0
        %v973 = vmax.f32 %v948, 0.0
        %v974 = vmax.f32 %v950, 0.0
        %v975 = vmax.f32 %v953, 0.0
        %v976 = vmax.f32 %v955, 0.0
        %v977 = vmax.f32 %v958, 0.0
        %v978 = vmax.f32 %v960, 0.0
        %v979 = vmax.f32 %v963, 0.0
        %v980 = vmax.f32 %v965, 0.0
        %v981 = vpack.c.bf16 %v968, %v967
        %v982 = vpack.c.bf16 %v970, %v969
        %v983 = vpack.c.bf16 %v972, %v971
        %v984 = vpack.c.bf16 %v974, %v973
        %v985 = vpack.c.bf16 %v976, %v975
        %v986 = vpack.c.bf16 %v978, %v977
        %v987 = vpack.c.bf16 %v980, %v979
        %v988 = vld [vmem:[#allocation10] sm:$0xf]
        %v989 = vld [vmem:[#allocation10 + $0x4] sm:$0xf]
        %v990 = vld [vmem:[#allocation10 + $0x8] sm:$0xf]
        %v991 = vld [vmem:[#allocation10 + $0xc] sm:$0xf]
        %v992 = vld [vmem:[#allocation10 + $0x10] sm:$0xf]
        %v993 = vld [vmem:[#allocation10 + $0x14] sm:$0xf]
        %v994 = vld [vmem:[#allocation10 + $0x18] sm:$0xf]
        %v995 = vld [vmem:[#allocation10 + $0x1c] sm:$0xf]
        %v996 = vld [vmem:[#allocation10 + $0x20] sm:$0xf]
        %v997 = vld [vmem:[#allocation10 + $0x24] sm:$0xf]
        %v998 = vld [vmem:[#allocation10 + $0x28] sm:$0xf]
        %v999 = vld [vmem:[#allocation10 + $0x2c] sm:$0xf]
        %v1000 = vld [vmem:[#allocation10 + $0x30] sm:$0xf]
        %v1001 = vld [vmem:[#allocation10 + $0x34] sm:$0xf]
        %v1002 = vld [vmem:[#allocation10 + $0x38] sm:$0xf]
        %v1003 = vld [vmem:[#allocation10 + $0x3c] sm:$0xf]
        %v1004 = vld [vmem:[%s8] sm:$0x1]
        %v1006 = vperm.slane %v1004, 0
        %v1024 = vunpack.c.l.b16 %v988
        %v1025 = vunpack.c.l.b16 %v989
        %v1026 = vunpack.c.l.b16 %v990
        %v1027 = vunpack.c.l.b16 %v991
        %v1028 = vunpack.c.l.b16 %v992
        %v1029 = vunpack.c.l.b16 %v993
        %v1030 = vunpack.c.l.b16 %v994
        %v1031 = vunpack.c.l.b16 %v995
        %v1032 = vunpack.c.l.b16 %v996
        %v1033 = vunpack.c.l.b16 %v997
        %v1034 = vunpack.c.l.b16 %v998
        %v1035 = vunpack.c.l.b16 %v999
        %v1036 = vunpack.c.l.b16 %v1000
        %v1037 = vunpack.c.l.b16 %v1001
        %v1038 = vunpack.c.l.b16 %v1002
        %v1039 = vunpack.c.l.b16 %v1003
        %v1040 = vpack.c.b16 %v1025, %v1024
        %v1041 = vpack.c.b16 %v1027, %v1026
        %v1042 = vpack.c.b16 %v1029, %v1028
        %v1043 = vpack.c.b16 %v1031, %v1030
        %v1044 = vpack.c.b16 %v1033, %v1032
        %v1045 = vpack.c.b16 %v1035, %v1034
        %v1046 = vpack.c.b16 %v1037, %v1036
        %v1047 = vpack.c.b16 %v1039, %v1038
        %1056 = vmatpush.bf16.msra.mxu0 %v1047
        %1057 = vmatpush.bf16.msra.mxu0 %v1046
        %1058 = vmatpush.bf16.msra.mxu0 %v1045
        %1059 = vmatpush.bf16.msra.mxu0 %v1044
        %1060 = vmatpush.bf16.msra.mxu0 %v1043
        %1061 = vmatpush.bf16.msra.mxu0 %v1042
        %1062 = vmatpush.bf16.msra.mxu0 %v1041
        %1063 = vmatpush.bf16.msra.mxu0 %v1040
        %1064 = vmatmul.bf16.gmra.mxu0 %v981
        %v1065 = vpop.f32.mrf.mxu0
        %v1066 = vadd.f32 %v1006, %v1065
        %v1067 = vpop.f32.mrf.mxu0
        %v1068 = vadd.f32 %v1006, %v1067
        %1069 = vmatmul.bf16.gmra.mxu0 %v982
        %v1070 = vpop.f32.mrf.mxu0
        %v1071 = vadd.f32 %v1006, %v1070
        %v1072 = vpop.f32.mrf.mxu0
        %v1073 = vadd.f32 %v1006, %v1072
        %1074 = vmatmul.bf16.gmra.mxu0 %v983
        %v1075 = vpop.f32.mrf.mxu0
        %v1076 = vadd.f32 %v1006, %v1075
        %v1077 = vpop.f32.mrf.mxu0
        %v1078 = vadd.f32 %v1006, %v1077
        %1079 = vmatmul.bf16.gmra.mxu0 %v984
        %v1080 = vpop.f32.mrf.mxu0
        %v1081 = vadd.f32 %v1006, %v1080
        %v1082 = vpop.f32.mrf.mxu0
        %v1083 = vadd.f32 %v1006, %v1082
        %1084 = vmatmul.bf16.gmra.mxu0 %v985
        %v1085 = vpop.f32.mrf.mxu0
        %v1086 = vadd.f32 %v1006, %v1085
        %v1087 = vpop.f32.mrf.mxu0
        %v1088 = vadd.f32 %v1006, %v1087
        %1089 = vmatmul.bf16.gmra.mxu0 %v986
        %v1090 = vpop.f32.mrf.mxu0
        %v1091 = vadd.f32 %v1006, %v1090
        %v1092 = vpop.f32.mrf.mxu0
        %v1093 = vadd.f32 %v1006, %v1092
        %1094 = vmatmul.bf16.gmra.mxu0 %v987
        %v1095 = vpop.f32.mrf.mxu0
        %v1096 = vadd.f32 %v1006, %v1095
        %v1097 = vpop.f32.mrf.mxu0
        %v1098 = vadd.f32 %v1006, %v1097
        %1099 = vdwg.mxu0
        %1100 = vmax.xlane.f32.xlu0 %v1066
        %v1101 = vpop.xlane.xlu0 %1100
        %1102 = vmax.xlane.f32.xlu0 %v1068
        %v1103 = vpop.xlane.xlu0 %1102
        %1104 = vmax.xlane.f32.xlu0 %v1071
        %v1105 = vpop.xlane.xlu0 %1104
        %1106 = vmax.xlane.f32.xlu0 %v1073
        %v1107 = vpop.xlane.xlu0 %1106
        %1108 = vmax.xlane.f32.xlu0 %v1076
        %v1109 = vpop.xlane.xlu0 %1108
        %1110 = vmax.xlane.f32.xlu0 %v1078
        %v1111 = vpop.xlane.xlu0 %1110
        %1112 = vmax.xlane.f32.xlu0 %v1081
        %v1113 = vpop.xlane.xlu0 %1112
        %1114 = vmax.xlane.f32.xlu0 %v1083
        %v1115 = vpop.xlane.xlu0 %1114
        %1116 = vmax.xlane.f32.xlu0 %v1086
        %v1117 = vpop.xlane.xlu0 %1116
        %1118 = vmax.xlane.f32.xlu0 %v1088
        %v1119 = vpop.xlane.xlu0 %1118
        %1120 = vmax.xlane.f32.xlu0 %v1091
        %v1121 = vpop.xlane.xlu0 %1120
        %1122 = vmax.xlane.f32.xlu0 %v1093
        %v1123 = vpop.xlane.xlu0 %1122
        %1124 = vmax.xlane.f32.xlu0 %v1096
        %v1125 = vpop.xlane.xlu0 %1124
        %1126 = vmax.xlane.f32.xlu0 %v1098
        %v1127 = vpop.xlane.xlu0 %1126
        %v1128 = vsub.f32 %v1066, %v1101
        %v1129 = vsub.f32 %v1068, %v1103
        %v1130 = vsub.f32 %v1071, %v1105
        %v1131 = vsub.f32 %v1073, %v1107
        %v1132 = vsub.f32 %v1076, %v1109
        %v1133 = vsub.f32 %v1078, %v1111
        %v1134 = vsub.f32 %v1081, %v1113
        %v1135 = vsub.f32 %v1083, %v1115
        %v1136 = vsub.f32 %v1086, %v1117
        %v1137 = vsub.f32 %v1088, %v1119
        %v1138 = vsub.f32 %v1091, %v1121
        %v1139 = vsub.f32 %v1093, %v1123
        %v1140 = vsub.f32 %v1096, %v1125
        %v1141 = vsub.f32 %v1098, %v1127
        %v1142 = vmul.f32 %v1128, 1.442695
        %v1143 = vpow.pop %v1142
        %v1144 = vmul.f32 %v1129, 1.442695
        %v1145 = vpow.pop %v1144
        %v1146 = vmul.f32 %v1130, 1.442695
        %v1147 = vpow.pop %v1146
        %v1148 = vmul.f32 %v1131, 1.442695
        %v1149 = vpow.pop %v1148
        %v1150 = vmul.f32 %v1132, 1.442695
        %v1151 = vpow.pop %v1150
        %v1152 = vmul.f32 %v1133, 1.442695
        %v1153 = vpow.pop %v1152
        %v1154 = vmul.f32 %v1134, 1.442695
        %v1155 = vpow.pop %v1154
        %v1156 = vmul.f32 %v1135, 1.442695
        %v1157 = vpow.pop %v1156
        %v1158 = vmul.f32 %v1136, 1.442695
        %v1159 = vpow.pop %v1158
        %v1160 = vmul.f32 %v1137, 1.442695
        %v1161 = vpow.pop %v1160
        %v1162 = vmul.f32 %v1138, 1.442695
        %v1163 = vpow.pop %v1162
        %v1164 = vmul.f32 %v1139, 1.442695
        %v1165 = vpow.pop %v1164
        %v1166 = vmul.f32 %v1140, 1.442695
        %v1167 = vpow.pop %v1166
        %v1168 = vmul.f32 %v1141, 1.442695
        %v1169 = vpow.pop %v1168
        %1170 = vadd.xlane.f32.xlu0 %v1143
        %v1171 = vpop.xlane.xlu0 %1170
        %1172 = vadd.xlane.f32.xlu0 %v1145
        %v1173 = vpop.xlane.xlu0 %1172
        %1174 = vadd.xlane.f32.xlu0 %v1147
        %v1175 = vpop.xlane.xlu0 %1174
        %1176 = vadd.xlane.f32.xlu0 %v1149
        %v1177 = vpop.xlane.xlu0 %1176
        %1178 = vadd.xlane.f32.xlu0 %v1151
        %v1179 = vpop.xlane.xlu0 %1178
        %1180 = vadd.xlane.f32.xlu0 %v1153
        %v1181 = vpop.xlane.xlu0 %1180
        %1182 = vadd.xlane.f32.xlu0 %v1155
        %v1183 = vpop.xlane.xlu0 %1182
        %1184 = vadd.xlane.f32.xlu0 %v1157
        %v1185 = vpop.xlane.xlu0 %1184
        %1186 = vadd.xlane.f32.xlu0 %v1159
        %v1187 = vpop.xlane.xlu0 %1186
        %1188 = vadd.xlane.f32.xlu0 %v1161
        %v1189 = vpop.xlane.xlu0 %1188
        %1190 = vadd.xlane.f32.xlu0 %v1163
        %v1191 = vpop.xlane.xlu0 %1190
        %1192 = vadd.xlane.f32.xlu0 %v1165
        %v1193 = vpop.xlane.xlu0 %1192
        %1194 = vadd.xlane.f32.xlu0 %v1167
        %v1195 = vpop.xlane.xlu0 %1194
        %1196 = vadd.xlane.f32.xlu0 %v1169
        %v1197 = vpop.xlane.xlu0 %1196
        %v1198 = vrcp.pop %v1171
        %v1199 = vmul.f32 %v1171, %v1198
        %v1200 = vsub.f32 1.0, %v1199
        %v1201 = vmul.f32 %v1198, %v1200
        %v1202 = vadd.f32 %v1198, %v1201
        %vm1203 = vweird.f32 %v1171
        %vm1204 = vweird.f32 %v1198
        %vm1205 = vmor %vm1203, %vm1204
        %v1206 = vsel %vm1205, %v1198, %v1202
        %v1207 = vand.u32 2147483647, %v1171
        %vm1208 = vcmp.eq.f32.partialorder %v1207, 8.507059e+37
        %v1209 = vand.u32 %v1171, 2147483648
        %v1210 = vor.u32 1.1754944e-38, %v1209
        %v1211 = vsel %vm1208, %v1210, %v1206
        %v1212 = vmul.f32 %v1143, %v1211
        %v1213 = vrcp.pop %v1173
        %v1214 = vmul.f32 %v1173, %v1213
        %v1215 = vsub.f32 1.0, %v1214
        %v1216 = vmul.f32 %v1213, %v1215
        %v1217 = vadd.f32 %v1213, %v1216
        %vm1218 = vweird.f32 %v1173
        %vm1219 = vweird.f32 %v1213
        %vm1220 = vmor %vm1218, %vm1219
        %v1221 = vsel %vm1220, %v1213, %v1217
        %v1222 = vand.u32 2147483647, %v1173
        %vm1223 = vcmp.eq.f32.partialorder %v1222, 8.507059e+37
        %v1224 = vand.u32 %v1173, 2147483648
        %v1225 = vor.u32 1.1754944e-38, %v1224
        %v1226 = vsel %vm1223, %v1225, %v1221
        %v1227 = vmul.f32 %v1145, %v1226
        %v1228 = vrcp.pop %v1175
        %v1229 = vmul.f32 %v1175, %v1228
        %v1230 = vsub.f32 1.0, %v1229
        %v1231 = vmul.f32 %v1228, %v1230
        %v1232 = vadd.f32 %v1228, %v1231
        %vm1233 = vweird.f32 %v1175
        %vm1234 = vweird.f32 %v1228
        %vm1235 = vmor %vm1233, %vm1234
        %v1236 = vsel %vm1235, %v1228, %v1232
        %v1237 = vand.u32 2147483647, %v1175
        %vm1238 = vcmp.eq.f32.partialorder %v1237, 8.507059e+37
        %v1239 = vand.u32 %v1175, 2147483648
        %v1240 = vor.u32 1.1754944e-38, %v1239
        %v1241 = vsel %vm1238, %v1240, %v1236
        %v1242 = vmul.f32 %v1147, %v1241
        %v1243 = vrcp.pop %v1177
        %v1244 = vmul.f32 %v1177, %v1243
        %v1245 = vsub.f32 1.0, %v1244
        %v1246 = vmul.f32 %v1243, %v1245
        %v1247 = vadd.f32 %v1243, %v1246
        %vm1248 = vweird.f32 %v1177
        %vm1249 = vweird.f32 %v1243
        %vm1250 = vmor %vm1248, %vm1249
        %v1251 = vsel %vm1250, %v1243, %v1247
        %v1252 = vand.u32 2147483647, %v1177
        %vm1253 = vcmp.eq.f32.partialorder %v1252, 8.507059e+37
        %v1254 = vand.u32 %v1177, 2147483648
        %v1255 = vor.u32 1.1754944e-38, %v1254
        %v1256 = vsel %vm1253, %v1255, %v1251
        %v1257 = vmul.f32 %v1149, %v1256
        %v1258 = vrcp.pop %v1179
        %v1259 = vmul.f32 %v1179, %v1258
        %v1260 = vsub.f32 1.0, %v1259
        %v1261 = vmul.f32 %v1258, %v1260
        %v1262 = vadd.f32 %v1258, %v1261
        %vm1263 = vweird.f32 %v1179
        %vm1264 = vweird.f32 %v1258
        %vm1265 = vmor %vm1263, %vm1264
        %v1266 = vsel %vm1265, %v1258, %v1262
        %v1267 = vand.u32 2147483647, %v1179
        %vm1268 = vcmp.eq.f32.partialorder %v1267, 8.507059e+37
        %v1269 = vand.u32 %v1179, 2147483648
        %v1270 = vor.u32 1.1754944e-38, %v1269
        %v1271 = vsel %vm1268, %v1270, %v1266
        %v1272 = vmul.f32 %v1151, %v1271
        %v1273 = vrcp.pop %v1181
        %v1274 = vmul.f32 %v1181, %v1273
        %v1275 = vsub.f32 1.0, %v1274
        %v1276 = vmul.f32 %v1273, %v1275
        %v1277 = vadd.f32 %v1273, %v1276
        %vm1278 = vweird.f32 %v1181
        %vm1279 = vweird.f32 %v1273
        %vm1280 = vmor %vm1278, %vm1279
        %v1281 = vsel %vm1280, %v1273, %v1277
        %v1282 = vand.u32 2147483647, %v1181
        %vm1283 = vcmp.eq.f32.partialorder %v1282, 8.507059e+37
        %v1284 = vand.u32 %v1181, 2147483648
        %v1285 = vor.u32 1.1754944e-38, %v1284
        %v1286 = vsel %vm1283, %v1285, %v1281
        %v1287 = vmul.f32 %v1153, %v1286
        %v1288 = vrcp.pop %v1183
        %v1289 = vmul.f32 %v1183, %v1288
        %v1290 = vsub.f32 1.0, %v1289
        %v1291 = vmul.f32 %v1288, %v1290
        %v1292 = vadd.f32 %v1288, %v1291
        %vm1293 = vweird.f32 %v1183
        %vm1294 = vweird.f32 %v1288
        %vm1295 = vmor %vm1293, %vm1294
        %v1296 = vsel %vm1295, %v1288, %v1292
        %v1297 = vand.u32 2147483647, %v1183
        %vm1298 = vcmp.eq.f32.partialorder %v1297, 8.507059e+37
        %v1299 = vand.u32 %v1183, 2147483648
        %v1300 = vor.u32 1.1754944e-38, %v1299
        %v1301 = vsel %vm1298, %v1300, %v1296
        %v1302 = vmul.f32 %v1155, %v1301
        %v1303 = vrcp.pop %v1185
        %v1304 = vmul.f32 %v1185, %v1303
        %v1305 = vsub.f32 1.0, %v1304
        %v1306 = vmul.f32 %v1303, %v1305
        %v1307 = vadd.f32 %v1303, %v1306
        %vm1308 = vweird.f32 %v1185
        %vm1309 = vweird.f32 %v1303
        %vm1310 = vmor %vm1308, %vm1309
        %v1311 = vsel %vm1310, %v1303, %v1307
        %v1312 = vand.u32 2147483647, %v1185
        %vm1313 = vcmp.eq.f32.partialorder %v1312, 8.507059e+37
        %v1314 = vand.u32 %v1185, 2147483648
        %v1315 = vor.u32 1.1754944e-38, %v1314
        %v1316 = vsel %vm1313, %v1315, %v1311
        %v1317 = vmul.f32 %v1157, %v1316
        %v1318 = vrcp.pop %v1187
        %v1319 = vmul.f32 %v1187, %v1318
        %v1320 = vsub.f32 1.0, %v1319
        %v1321 = vmul.f32 %v1318, %v1320
        %v1322 = vadd.f32 %v1318, %v1321
        %vm1323 = vweird.f32 %v1187
        %vm1324 = vweird.f32 %v1318
        %vm1325 = vmor %vm1323, %vm1324
        %v1326 = vsel %vm1325, %v1318, %v1322
        %v1327 = vand.u32 2147483647, %v1187
        %vm1328 = vcmp.eq.f32.partialorder %v1327, 8.507059e+37
        %v1329 = vand.u32 %v1187, 2147483648
        %v1330 = vor.u32 1.1754944e-38, %v1329
        %v1331 = vsel %vm1328, %v1330, %v1326
        %v1332 = vmul.f32 %v1159, %v1331
        %v1333 = vrcp.pop %v1189
        %v1334 = vmul.f32 %v1189, %v1333
        %v1335 = vsub.f32 1.0, %v1334
        %v1336 = vmul.f32 %v1333, %v1335
        %v1337 = vadd.f32 %v1333, %v1336
        %vm1338 = vweird.f32 %v1189
        %vm1339 = vweird.f32 %v1333
        %vm1340 = vmor %vm1338, %vm1339
        %v1341 = vsel %vm1340, %v1333, %v1337
        %v1342 = vand.u32 2147483647, %v1189
        %vm1343 = vcmp.eq.f32.partialorder %v1342, 8.507059e+37
        %v1344 = vand.u32 %v1189, 2147483648
        %v1345 = vor.u32 1.1754944e-38, %v1344
        %v1346 = vsel %vm1343, %v1345, %v1341
        %v1347 = vmul.f32 %v1161, %v1346
        %v1348 = vrcp.pop %v1191
        %v1349 = vmul.f32 %v1191, %v1348
        %v1350 = vsub.f32 1.0, %v1349
        %v1351 = vmul.f32 %v1348, %v1350
        %v1352 = vadd.f32 %v1348, %v1351
        %vm1353 = vweird.f32 %v1191
        %vm1354 = vweird.f32 %v1348
        %vm1355 = vmor %vm1353, %vm1354
        %v1356 = vsel %vm1355, %v1348, %v1352
        %v1357 = vand.u32 2147483647, %v1191
        %vm1358 = vcmp.eq.f32.partialorder %v1357, 8.507059e+37
        %v1359 = vand.u32 %v1191, 2147483648
        %v1360 = vor.u32 1.1754944e-38, %v1359
        %v1361 = vsel %vm1358, %v1360, %v1356
        %v1362 = vmul.f32 %v1163, %v1361
        %v1363 = vrcp.pop %v1193
        %v1364 = vmul.f32 %v1193, %v1363
        %v1365 = vsub.f32 1.0, %v1364
        %v1366 = vmul.f32 %v1363, %v1365
        %v1367 = vadd.f32 %v1363, %v1366
        %vm1368 = vweird.f32 %v1193
        %vm1369 = vweird.f32 %v1363
        %vm1370 = vmor %vm1368, %vm1369
        %v1371 = vsel %vm1370, %v1363, %v1367
        %v1372 = vand.u32 2147483647, %v1193
        %vm1373 = vcmp.eq.f32.partialorder %v1372, 8.507059e+37
        %v1374 = vand.u32 %v1193, 2147483648
        %v1375 = vor.u32 1.1754944e-38, %v1374
        %v1376 = vsel %vm1373, %v1375, %v1371
        %v1377 = vmul.f32 %v1165, %v1376
        %v1378 = vrcp.pop %v1195
        %v1379 = vmul.f32 %v1195, %v1378
        %v1380 = vsub.f32 1.0, %v1379
        %v1381 = vmul.f32 %v1378, %v1380
        %v1382 = vadd.f32 %v1378, %v1381
        %vm1383 = vweird.f32 %v1195
        %vm1384 = vweird.f32 %v1378
        %vm1385 = vmor %vm1383, %vm1384
        %v1386 = vsel %vm1385, %v1378, %v1382
        %v1387 = vand.u32 2147483647, %v1195
        %vm1388 = vcmp.eq.f32.partialorder %v1387, 8.507059e+37
        %v1389 = vand.u32 %v1195, 2147483648
        %v1390 = vor.u32 1.1754944e-38, %v1389
        %v1391 = vsel %vm1388, %v1390, %v1386
        %v1392 = vmul.f32 %v1167, %v1391
        %v1393 = vrcp.pop %v1197
        %v1394 = vmul.f32 %v1197, %v1393
        %v1395 = vsub.f32 1.0, %v1394
        %v1396 = vmul.f32 %v1393, %v1395
        %v1397 = vadd.f32 %v1393, %v1396
        %vm1398 = vweird.f32 %v1197
        %vm1399 = vweird.f32 %v1393
        %vm1400 = vmor %vm1398, %vm1399
        %v1401 = vsel %vm1400, %v1393, %v1397
        %v1402 = vand.u32 2147483647, %v1197
        %vm1403 = vcmp.eq.f32.partialorder %v1402, 8.507059e+37
        %v1404 = vand.u32 %v1197, 2147483648
        %v1405 = vor.u32 1.1754944e-38, %v1404
        %v1406 = vsel %vm1403, %v1405, %v1401
        %v1407 = vmul.f32 %v1169, %v1406
        %1408 = vst [vmem:[%s427] sm:$0xff] %v1212
        %1409 = vst [vmem:[%s427 + $0x8] sm:$0xff] %v1227
        %1410 = vst [vmem:[%s427 + $0x10] sm:$0xff] %v1242
        %1411 = vst [vmem:[%s427 + $0x18] sm:$0xff] %v1257
        %1412 = vst [vmem:[%s427 + $0x20] sm:$0xff] %v1272
        %1413 = vst [vmem:[%s427 + $0x28] sm:$0xff] %v1287
        %1414 = vst [vmem:[%s427 + $0x30] sm:$0xff] %v1302
        %1415 = vst [vmem:[%s427 + $0x38] sm:$0xff] %v1317
        %1416 = vst [vmem:[%s427 + $0x40] sm:$0xff] %v1332
        %1417 = vst [vmem:[%s427 + $0x48] sm:$0xff] %v1347
        %1418 = vst [vmem:[%s427 + $0x50] sm:$0xff] %v1362
        %1419 = vst [vmem:[%s427 + $0x58] sm:$0xff] %v1377
        %1420 = vst [vmem:[%s427 + $0x60] sm:$0xff] %v1392
        %1421 = vst [vmem:[%s427 + $0x68] sm:$0xff] %v1407
        %s1422 = sand.u32 %s230, 1
        %s1423 = scalar_lea.sflag [#allocation4], %s1422
        %s1424 = sand.u32 %s230, 1
        %s1425 = smul.addr %s1424, 112
        %s1426 = scalar_lea.vmem [#allocation11], %s1425
        // Predicated region
        $region77: #{tpu_custom_call.1} parent=55 // pred_check
          %p1427 = pneg %p240
        $region78: #{tpu_custom_call.1} parent=55 // pred_check_branch
          %1429 = sbr.rel (%p1427) target = $region80
        $region79: #{tpu_custom_call.1} parent=55 // pred_region
          %s1430 = smul.u32 14, %s28
          %s1431 = ssub.s32 25, %s1430
          %p1432 = scmp.lt.s32.totalorder %s1431, 14
          %s1433 = scalar_select %p1432, %s1431, 14
          %s1434 = smul.u32 8, %s1433
          %s1435 = ssub.s32 112, %s1434
          %s1436 = sshll.u32 %s1435, 4
          %1437 = vsyncadd %s1423, %s1436
          %p1438 = scmp.ne.s32.totalorder 0, %s1434
          %s1439 = smul.addr %s1430, 8
          %s1440 = scalar_lea.hbm %s9, %s1439
          %s1441 = smul.u32 8, %s1433
          %s1442 = sshll.u32 %s1426, 4
          %s1443 = int_to_ptr.vmem [resolvable:$true] %s1442
          %s1444 = sshll.u32 %s1440, 4
          %s1445 = int_to_ptr.hbm [resolvable:$true] %s1444
          %s1446 = sshll.u32 %s1441, 4
          %1450 = dma.vmem_to_hbm [thread:$0]  (%p1438), %s1443, %s1446, %s1445, %s1423, 128, 128, 8
        $region80: #{tpu_custom_call.1} parent=55 // pred_fallthru
          _
      $region56: #{tpu_custom_call.1} parent=5 // pred_fallthru
        _
      %p1451 = scmp.le.s32.totalorder 2, %s23
      // Predicated region
      $region81: #{tpu_custom_call.1} parent=5 // pred_check
        %p1452 = pneg %p1451
      $region82: #{tpu_custom_call.1} parent=5 // pred_check_branch
        %1454 = sbr.rel (%p1452) target = $region84
      $region83: #{tpu_custom_call.1} parent=5 // pred_region
        %s1455 = ssub.s32 %s23, 2
        // Predicated region
        $region85: #{tpu_custom_call.1} parent=83 // pred_check
          %p1456 = pneg %p246
        $region86: #{tpu_custom_call.1} parent=83 // pred_check_branch
          %1458 = sbr.rel (%p1456) target = $region88
        $region87: #{tpu_custom_call.1} parent=83 // pred_region
          %s1459 = sand.u32 %s231, 1
          %s1460 = scalar_lea.sflag [#allocation4], %s1459
          %s1461 = sand.u32 %s231, 1
          %s1462 = smul.addr %s1461, 112
          %s1463 = scalar_lea.vmem [#allocation11], %s1462
          %1465 = dma.done %s1460, 1792
        $region88: #{tpu_custom_call.1} parent=83 // pred_fallthru
          _
      $region84: #{tpu_custom_call.1} parent=5 // pred_fallthru
        _
    $region6: #{tpu_custom_call.1} parent=1 // loop_footer
      %s27 = sadd.s32 1, %s23
    $region7: #{tpu_custom_call.1} parent=1 // loop_footer_branch
      %22 = sbr.rel target = $region3
    $region8: #{tpu_custom_call.1} parent=1 // loop_exit
      _
    %1466 = vsyncpa [#allocation3], 1
    %s1467 = scalar_lea.sflag [#allocation3], 1
    %1468 = vsyncpa %s1467, 1
    %1469 = vsyncpa [#allocation6], 1
    %1470 = vsyncpa [#allocation9], 1
    %1471 = vsyncpa [#allocation4], 1
    %s1472 = scalar_lea.sflag [#allocation4], 1
    %1473 = vsyncpa %s1472, 1

</llo_original>
